<compile_context>
chip_gen: v7x
topology: tpu7x:2x2x1
jax: 0.10.0
libtpu: 0.0.40
codegen_flags: <defaults>
</compile_context>

<pallas_src>
import numpy as np
import jax
import jax.numpy as jnp
from jax.experimental import pallas as pl
from jax.experimental.pallas import tpu as pltpu

OUT_PAD = 128  # lane-dense output width; real output_dim is sliced in the wrapper


# ---------------------------------------------------------------------------
# Pallas kernel: full forward pass for ONE block-diagonal super-graph
# (k graphs = n_blk nodes) per grid step.
# ---------------------------------------------------------------------------
def gat_block_kernel(x_ref, bias_ref, pool_ref,
                     w1_ref, b1_ref, w2_ref, b2_ref, wp_ref, bp_ref,
                     out_ref):
    f32, bf16 = jnp.float32, jnp.bfloat16
    n_blk = bias_ref.shape[0]
    H = b1_ref.shape[-1]

    # Additive adjacency mask (0 edge / -1e30 non-edge); cast once, reused by both layers.
    adj_bias = bias_ref[...].astype(f32)                      # (n_blk, n_blk)
    ones_col = jnp.ones((n_blk, 1), f32)                      # rank-1 broadcast helper

    def gat_layer(h_in_bf16, w_aug_ref, b_ref):
        # Fused feature + attention projection: one bf16 MXU matmul (f32 accum)
        # yields h (lanes 0..H-1) and the a_src / a_dst scores (lanes H, H+1).
        h_al = jnp.dot(h_in_bf16, w_aug_ref[...],
                       preferred_element_type=f32)            # (n_blk, H+2)
        h = h_al[:, :H]
        al_src = h_al[:, H:H + 1]                             # (n_blk, 1)
        al_dst = h_al[:, H + 1:H + 2]                         # (n_blk, 1)

        # Rank-1 (K=1) MXU broadcast: al_src_b[i, j] = al_src[j].
        # Kept on the MXU (shape-safe lowering); overlaps with the VPU-bound
        # masked softmax below, so it is off the critical path.
        al_src_b = jax.lax.dot_general(
            ones_col, al_src,
            dimension_numbers=(((1,), (1,)), ((), ())),
            preferred_element_type=f32)                       # (n_blk, n_blk)

        e = al_dst + al_src_b                                 # logits[dst, src]
        e = jnp.maximum(e, 0.2 * e)                           # LeakyReLU(0.2) as one vmax
        e = e + adj_bias                                      # masking as a single add
        m = jnp.max(e, axis=-1, keepdims=True)
        p = jnp.exp(e - m)                                    # non-edges underflow to exactly 0
        denom = jnp.sum(p, axis=-1, keepdims=True)            # >= 1 (self loop present)
        attn = p * pl.reciprocal(denom, approx=True)          # EUP slot, effectively free

        out = jnp.dot(attn.astype(bf16), h.astype(bf16),
                      preferred_element_type=f32)             # (n_blk, H)
        return out + b_ref[...]                               # GATConv bias

    x1 = jnp.maximum(gat_layer(x_ref[...], w1_ref, b1_ref), 0.0)
    x2 = jnp.maximum(gat_layer(x1.astype(bf16), w2_ref, b2_ref), 0.0)

    # node_predictor (wp/bp pre-padded to OUT_PAD lanes -> unmasked stores)
    scores = jnp.dot(x2.astype(bf16), wp_ref[...],
                     preferred_element_type=f32) + bp_ref[...]          # (n_blk, OUT_PAD)

    # batched global_mean_pool: block-diagonal pool rows (k, n_blk) @ (n_blk, OUT_PAD)
    out_ref[...] = jnp.dot(pool_ref[...], scores, preferred_element_type=f32)


# ---------------------------------------------------------------------------
# Wrapper: block-diagonal packing + parameter fusing + pallas_call
# ---------------------------------------------------------------------------
def gat_model_forward(x, adj_g, params, graphs_per_block=16):
    """x: (N, F) f32 node features, nodes ordered graph-by-graph.
       adj_g: (G, n, n) dense 0/1 adjacency per graph, adj_g[g, dst, src], incl. self loops."""
    (w1, a1s, a1d, b1, w2, a2s, a2d, b2, wp, bp) = params
    f32, bf16 = jnp.float32, jnp.bfloat16
    G, n, _ = adj_g.shape
    N, F = x.shape
    H = w1.shape[1]
    Dout = wp.shape[1]

    k = max(1, min(int(graphs_per_block), G))   # graphs per super-graph block
    n_b = -(-G // k)                            # grid steps
    G_pad = n_b * k
    n_blk = k * n                               # nodes per block

    # ---- parameter packing (cold path, runs once) ----
    w1_aug = jnp.concatenate([w1, w1 @ a1s, w1 @ a1d], axis=1).astype(bf16)   # (F, H+2)
    w2_aug = jnp.concatenate([w2, w2 @ a2s, w2 @ a2d], axis=1).astype(bf16)   # (H, H+2)
    wp_pad = jnp.zeros((H, OUT_PAD), f32).at[:, :Dout].set(wp).astype(bf16)
    bp_pad = jnp.zeros((1, OUT_PAD), f32).at[:, :Dout].set(bp)

    # ---- block-diagonal super-graph packing ----
    x_pad = jnp.zeros((G_pad * n, F), f32).at[:N].set(x)
    x_blk = x_pad.reshape(n_b, n_blk, F).astype(bf16)

    adj_pad = jnp.zeros((G_pad, n, n), f32).at[:G].set(adj_g.astype(f32))
    blocks = adj_pad.reshape(n_b, k, n, n)
    eye_k = jnp.eye(k, dtype=f32)
    dense = blocks[:, :, None, :, :] * eye_k[None, :, :, None, None]          # (n_b,k,k,n,n)
    adj_dense = dense.transpose(0, 1, 3, 2, 4).reshape(n_b, n_blk, n_blk)
    adj_bias = jnp.where(adj_dense > 0, 0.0, -1e30).astype(bf16)              # additive mask

    valid = (jnp.arange(G_pad) < G).astype(f32).reshape(n_b, k)               # zero rows for padded graphs
    pool_base = jnp.repeat(jnp.eye(k, dtype=f32), n, axis=1) / n              # (k, n_blk)
    pool_blk = valid[:, :, None] * pool_base[None, :, :]                      # (n_b, k, n_blk)

    vmem_full = pl.BlockSpec(memory_space=pltpu.MemorySpace.VMEM)             # small resident params

    out = pl.pallas_call(
        gat_block_kernel,
        out_shape=jax.ShapeDtypeStruct((n_b, k, OUT_PAD), f32),
        grid=(n_b,),
        in_specs=[
            pl.BlockSpec((None, n_blk, F), lambda b: (b, 0, 0)),      # x (bf16)
            pl.BlockSpec((None, n_blk, n_blk), lambda b: (b, 0, 0)),  # additive adj mask (bf16)
            pl.BlockSpec((None, k, n_blk), lambda b: (b, 0, 0)),      # pool rows (f32)
            vmem_full, vmem_full,                                     # w1_aug, b1
            vmem_full, vmem_full,                                     # w2_aug, b2
            vmem_full, vmem_full,                                     # wp_pad, bp_pad
        ],
        out_specs=pl.BlockSpec((None, k, OUT_PAD), lambda b: (b, 0, 0)),
        compiler_params=pltpu.CompilerParams(
            dimension_semantics=("parallel",)),
    )(x_blk, adj_bias, pool_blk, w1_aug, b1, w2_aug, b2, wp_pad, bp_pad)

    return out.reshape(G_pad, OUT_PAD)[:G, :Dout]


def pick_graphs_per_block(num_graphs, nodes_per_graph):
    """Size super-graph blocks for the MXU (~128 nodes on v5e, ~256 on v6e/v7x),
    keeping >= 2 grid steps where possible so v7x's two TensorCores both get work."""
    try:
        kind = jax.devices()[0].device_kind.lower()
    except Exception:
        kind = ""
    target_nodes = 256 if ("v6" in kind or "v7" in kind) else 128
    k = max(1, target_nodes // max(1, nodes_per_graph))
    k = min(k, max(1, -(-num_graphs // 2)))
    return k


# ---------------------------------------------------------------------------
# Pure-JAX reference (same math & matmul precision: fused bf16 projections,
# f32 accumulation; exact division instead of the approx EUP reciprocal)
# ---------------------------------------------------------------------------
def gat_model_ref(x, adj, params, pool):
    (w1, a1s, a1d, b1, w2, a2s, a2d, b2, wp, bp) = params
    bf16, f32 = jnp.bfloat16, jnp.float32

    def bdot(a, b):
        return jnp.dot(a.astype(bf16), b.astype(bf16), preferred_element_type=f32)

    def layer(h_in, w, a_src, a_dst, bias):
        H = w.shape[1]
        w_aug = jnp.concatenate([w, w @ a_src, w @ a_dst], axis=1)
        h_al = bdot(h_in, w_aug)
        h = h_al[:, :H]
        al_src = h_al[:, H]
        al_dst = h_al[:, H + 1]
        e = al_dst[:, None] + al_src[None, :]
        e = jnp.maximum(e, 0.2 * e)
        e = jnp.where(adj > 0, e, -1e30)
        e = e - jnp.max(e, axis=-1, keepdims=True)
        p = jnp.exp(e)
        attn = p / jnp.sum(p, axis=-1, keepdims=True)
        return bdot(attn, h) + bias

    x1 = jnp.maximum(layer(x, w1, a1s, a1d, b1), 0.0)
    x2 = jnp.maximum(layer(x1, w2, a2s, a2d, b2), 0.0)
    return pool @ (bdot(x2, wp) + bp)


# ---------------------------------------------------------------------------
# Driver
# ---------------------------------------------------------------------------
if __name__ == "__main__":
    input_dim, hidden_dim, output_dim, heads = 8, 16, 4, 1
    num_graphs, nodes_per_graph = 32, 8
    n = nodes_per_graph
    N = num_graphs * n

    # deterministic graphs: bidirectional ring inside each graph + self loops
    adj_g = np.zeros((num_graphs, n, n), dtype=np.float32)    # adj_g[g, dst, src]
    for g in range(num_graphs):
        for t in range(n):
            s, d = t, (t + 1) % n
            adj_g[g, d, s] = 1.0
            adj_g[g, s, d] = 1.0
        adj_g[g, np.arange(n), np.arange(n)] = 1.0            # add_self_loops=True

    # full-batch dense adjacency + mean-pool matrix for the reference
    adj = np.zeros((N, N), dtype=np.float32)
    pool = np.zeros((num_graphs, N), dtype=np.float32)
    for g in range(num_graphs):
        adj[g * n:(g + 1) * n, g * n:(g + 1) * n] = adj_g[g]
        pool[g, g * n:(g + 1) * n] = 1.0 / n

    # deterministic inputs / parameters
    key = jax.random.PRNGKey(0)
    ks = jax.random.split(key, 12)
    f32 = jnp.float32
    x = jax.random.normal(ks[0], (N, input_dim), f32)

    H = hidden_dim * heads
    w1 = 0.3 * jax.random.normal(ks[1], (input_dim, H), f32)
    a1s = 0.3 * jax.random.normal(ks[2], (H, 1), f32)
    a1d = 0.3 * jax.random.normal(ks[3], (H, 1), f32)
    b1 = 0.1 * jax.random.normal(ks[4], (1, H), f32)
    w2 = 0.3 * jax.random.normal(ks[5], (H, H), f32)
    a2s = 0.3 * jax.random.normal(ks[6], (H, 1), f32)
    a2d = 0.3 * jax.random.normal(ks[7], (H, 1), f32)
    b2 = 0.1 * jax.random.normal(ks[8], (1, H), f32)
    wp = 0.3 * jax.random.normal(ks[9], (H, output_dim), f32)
    bp = 0.1 * jax.random.normal(ks[10], (1, output_dim), f32)
    params = (w1, a1s, a1d, b1, w2, a2s, a2d, b2, wp, bp)

    k_blk = pick_graphs_per_block(num_graphs, nodes_per_graph)
    out = gat_model_forward(x, jnp.asarray(adj_g), params, graphs_per_block=k_blk)
    out = jax.block_until_ready(out)

    ref = gat_model_ref(x, jnp.asarray(adj), params, jnp.asarray(pool))
    # tolerance covers the approx EUP reciprocal in the kernel's softmax
    np.testing.assert_allclose(np.asarray(out), np.asarray(ref), rtol=2e-2, atol=2e-2)
    assert out.shape == (num_graphs, output_dim)

    print("KERNEL_OK")
</pallas_src>

<mosaic_0001>
module attributes {stable_mosaic.version = 11 : i64} {
  func.func @gat_block_kernel(%arg0: i32, %arg1: memref<1x128x8xbf16, #tpu.memory_space<vmem>>, %arg2: memref<1x128x128xbf16, #tpu.memory_space<vmem>>, %arg3: memref<1x16x128xf32, #tpu.memory_space<vmem>>, %arg4: memref<8x18xbf16, #tpu.memory_space<vmem>>, %arg5: memref<1x16xf32, #tpu.memory_space<vmem>>, %arg6: memref<16x18xbf16, #tpu.memory_space<vmem>>, %arg7: memref<1x16xf32, #tpu.memory_space<vmem>>, %arg8: memref<16x128xbf16, #tpu.memory_space<vmem>>, %arg9: memref<1x128xf32, #tpu.memory_space<vmem>>, %arg10: memref<1x16x128xf32, #tpu.memory_space<vmem>>) attributes {dimension_semantics = [#tpu.dimension_semantics<parallel>], iteration_bounds = array<i64: 2>, scalar_prefetch = 0 : i64, scratch_operands = 0 : i64, tpu.core_type = #tpu.core_type<tc>, window_params = [{transform_indices = @transform_0, window_bounds = array<i64: 1, 128, 8>}, {transform_indices = @transform_1, window_bounds = array<i64: 1, 128, 128>}, {transform_indices = @transform_2, window_bounds = array<i64: 1, 16, 128>}, {pipeline_mode = #tpu.pipeline_mode<synchronous>, transform_indices = @transform_3, window_bounds = array<i64: 8, 18>}, {pipeline_mode = #tpu.pipeline_mode<synchronous>, transform_indices = @transform_4, window_bounds = array<i64: 1, 16>}, {pipeline_mode = #tpu.pipeline_mode<synchronous>, transform_indices = @transform_5, window_bounds = array<i64: 16, 18>}, {pipeline_mode = #tpu.pipeline_mode<synchronous>, transform_indices = @transform_6, window_bounds = array<i64: 1, 16>}, {pipeline_mode = #tpu.pipeline_mode<synchronous>, transform_indices = @transform_7, window_bounds = array<i64: 16, 128>}, {pipeline_mode = #tpu.pipeline_mode<synchronous>, transform_indices = @transform_8, window_bounds = array<i64: 1, 128>}, {transform_indices = @transform_9, window_bounds = array<i64: 1, 16, 128>}]} {
    %c0 = arith.constant 0 : index
    %c0_0 = arith.constant 0 : index
    %c0_1 = arith.constant 0 : index
    %0 = vector.load %arg2[%c0, %c0_0, %c0_1] : memref<1x128x128xbf16, #tpu.memory_space<vmem>>, vector<1x128x128xbf16>
    %1 = vector.shape_cast %0 : vector<1x128x128xbf16> to vector<128x128xbf16>
    %2 = arith.extf %1 : vector<128x128xbf16> to vector<128x128xf32>
    %cst = arith.constant 1.000000e+00 : f32
    %3 = vector.broadcast %cst : f32 to vector<128x1xf32>
    %c0_2 = arith.constant 0 : index
    %c0_3 = arith.constant 0 : index
    %c0_4 = arith.constant 0 : index
    %4 = vector.load %arg1[%c0_2, %c0_3, %c0_4] : memref<1x128x8xbf16, #tpu.memory_space<vmem>>, vector<1x128x8xbf16>
    %5 = vector.shape_cast %4 : vector<1x128x8xbf16> to vector<128x8xbf16>
    %c0_5 = arith.constant 0 : index
    %c0_6 = arith.constant 0 : index
    %6 = vector.load %arg4[%c0_5, %c0_6] : memref<8x18xbf16, #tpu.memory_space<vmem>>, vector<8x18xbf16>
    %cst_7 = arith.constant dense<0.000000e+00> : vector<128x18xf32>
    %7 = tpu.matmul %5, %6, %cst_7 {dimension_numbers = #tpu.dot_dimension_numbers<[1], [0], [0], [1], [0, 0, 1, 1], [], []>} : vector<128x8xbf16>, vector<8x18xbf16>, vector<128x18xf32> -> vector<128x18xf32>
    %8 = vector.extract_strided_slice %7 {offsets = [0, 0], sizes = [128, 16], strides = [1, 1]} : vector<128x18xf32> to vector<128x16xf32>
    %9 = vector.extract_strided_slice %7 {offsets = [0, 16], sizes = [128, 1], strides = [1, 1]} : vector<128x18xf32> to vector<128x1xf32>
    %10 = vector.extract_strided_slice %7 {offsets = [0, 17], sizes = [128, 1], strides = [1, 1]} : vector<128x18xf32> to vector<128x1xf32>
    %cst_8 = arith.constant dense<0.000000e+00> : vector<128x128xf32>
    %11 = tpu.matmul %3, %9, %cst_8 {dimension_numbers = #tpu.dot_dimension_numbers<[1], [1], [0], [0], [0, 0, 1, 0], [], []>} : vector<128x1xf32>, vector<128x1xf32>, vector<128x128xf32> -> vector<128x128xf32>
    %12 = vector.broadcast %10 : vector<128x1xf32> to vector<128x128xf32>
    %13 = arith.addf %12, %11 : vector<128x128xf32>
    %cst_9 = arith.constant 2.000000e-01 : f32
    %14 = vector.broadcast %cst_9 : f32 to vector<128x128xf32>
    %15 = arith.mulf %14, %13 : vector<128x128xf32>
    %16 = arith.maximumf %13, %15 : vector<128x128xf32>
    %17 = arith.addf %16, %2 : vector<128x128xf32>
    %cst_10 = arith.constant dense<0xFF800000> : vector<128xf32>
    %18 = vector.multi_reduction <maximumf>, %17, %cst_10 [1] : vector<128x128xf32> to vector<128xf32>
    %19 = vector.shape_cast %18 : vector<128xf32> to vector<128x1xf32>
    %20 = vector.broadcast %19 : vector<128x1xf32> to vector<128x128xf32>
    %21 = arith.subf %17, %20 : vector<128x128xf32>
    %22 = math.exp %21 : vector<128x128xf32>
    %cst_11 = arith.constant dense<0.000000e+00> : vector<128xf32>
    %23 = vector.multi_reduction <add>, %22, %cst_11 [1] : vector<128x128xf32> to vector<128xf32>
    %24 = vector.shape_cast %23 : vector<128xf32> to vector<128x1xf32>
    %25 = tpu.reciprocal %24 {approx = true} : vector<128x1xf32> -> vector<128x1xf32>
    %26 = vector.broadcast %25 : vector<128x1xf32> to vector<128x128xf32>
    %27 = arith.mulf %22, %26 : vector<128x128xf32>
    %28 = arith.truncf %27 : vector<128x128xf32> to vector<128x128xbf16>
    %29 = arith.truncf %8 : vector<128x16xf32> to vector<128x16xbf16>
    %cst_12 = arith.constant dense<0.000000e+00> : vector<128x16xf32>
    %30 = tpu.matmul %28, %29, %cst_12 {dimension_numbers = #tpu.dot_dimension_numbers<[1], [0], [0], [1], [0, 0, 1, 1], [], []>} : vector<128x128xbf16>, vector<128x16xbf16>, vector<128x16xf32> -> vector<128x16xf32>
    %c0_13 = arith.constant 0 : index
    %c0_14 = arith.constant 0 : index
    %31 = vector.load %arg5[%c0_13, %c0_14] : memref<1x16xf32, #tpu.memory_space<vmem>>, vector<1x16xf32>
    %32 = vector.broadcast %31 : vector<1x16xf32> to vector<128x16xf32>
    %33 = arith.addf %30, %32 : vector<128x16xf32>
    %cst_15 = arith.constant 0.000000e+00 : f32
    %34 = vector.broadcast %cst_15 : f32 to vector<128x16xf32>
    %35 = arith.maximumf %33, %34 : vector<128x16xf32>
    %36 = arith.truncf %35 : vector<128x16xf32> to vector<128x16xbf16>
    %c0_16 = arith.constant 0 : index
    %c0_17 = arith.constant 0 : index
    %37 = vector.load %arg6[%c0_16, %c0_17] : memref<16x18xbf16, #tpu.memory_space<vmem>>, vector<16x18xbf16>
    %cst_18 = arith.constant dense<0.000000e+00> : vector<128x18xf32>
    %38 = tpu.matmul %36, %37, %cst_18 {dimension_numbers = #tpu.dot_dimension_numbers<[1], [0], [0], [1], [0, 0, 1, 1], [], []>} : vector<128x16xbf16>, vector<16x18xbf16>, vector<128x18xf32> -> vector<128x18xf32>
    %39 = vector.extract_strided_slice %38 {offsets = [0, 0], sizes = [128, 16], strides = [1, 1]} : vector<128x18xf32> to vector<128x16xf32>
    %40 = vector.extract_strided_slice %38 {offsets = [0, 16], sizes = [128, 1], strides = [1, 1]} : vector<128x18xf32> to vector<128x1xf32>
    %41 = vector.extract_strided_slice %38 {offsets = [0, 17], sizes = [128, 1], strides = [1, 1]} : vector<128x18xf32> to vector<128x1xf32>
    %cst_19 = arith.constant dense<0.000000e+00> : vector<128x128xf32>
    %42 = tpu.matmul %3, %40, %cst_19 {dimension_numbers = #tpu.dot_dimension_numbers<[1], [1], [0], [0], [0, 0, 1, 0], [], []>} : vector<128x1xf32>, vector<128x1xf32>, vector<128x128xf32> -> vector<128x128xf32>
    %43 = vector.broadcast %41 : vector<128x1xf32> to vector<128x128xf32>
    %44 = arith.addf %43, %42 : vector<128x128xf32>
    %cst_20 = arith.constant 2.000000e-01 : f32
    %45 = vector.broadcast %cst_20 : f32 to vector<128x128xf32>
    %46 = arith.mulf %45, %44 : vector<128x128xf32>
    %47 = arith.maximumf %44, %46 : vector<128x128xf32>
    %48 = arith.addf %47, %2 : vector<128x128xf32>
    %cst_21 = arith.constant dense<0xFF800000> : vector<128xf32>
    %49 = vector.multi_reduction <maximumf>, %48, %cst_21 [1] : vector<128x128xf32> to vector<128xf32>
    %50 = vector.shape_cast %49 : vector<128xf32> to vector<128x1xf32>
    %51 = vector.broadcast %50 : vector<128x1xf32> to vector<128x128xf32>
    %52 = arith.subf %48, %51 : vector<128x128xf32>
    %53 = math.exp %52 : vector<128x128xf32>
    %cst_22 = arith.constant dense<0.000000e+00> : vector<128xf32>
    %54 = vector.multi_reduction <add>, %53, %cst_22 [1] : vector<128x128xf32> to vector<128xf32>
    %55 = vector.shape_cast %54 : vector<128xf32> to vector<128x1xf32>
    %56 = tpu.reciprocal %55 {approx = true} : vector<128x1xf32> -> vector<128x1xf32>
    %57 = vector.broadcast %56 : vector<128x1xf32> to vector<128x128xf32>
    %58 = arith.mulf %53, %57 : vector<128x128xf32>
    %59 = arith.truncf %58 : vector<128x128xf32> to vector<128x128xbf16>
    %60 = arith.truncf %39 : vector<128x16xf32> to vector<128x16xbf16>
    %cst_23 = arith.constant dense<0.000000e+00> : vector<128x16xf32>
    %61 = tpu.matmul %59, %60, %cst_23 {dimension_numbers = #tpu.dot_dimension_numbers<[1], [0], [0], [1], [0, 0, 1, 1], [], []>} : vector<128x128xbf16>, vector<128x16xbf16>, vector<128x16xf32> -> vector<128x16xf32>
    %c0_24 = arith.constant 0 : index
    %c0_25 = arith.constant 0 : index
    %62 = vector.load %arg7[%c0_24, %c0_25] : memref<1x16xf32, #tpu.memory_space<vmem>>, vector<1x16xf32>
    %63 = vector.broadcast %62 : vector<1x16xf32> to vector<128x16xf32>
    %64 = arith.addf %61, %63 : vector<128x16xf32>
    %cst_26 = arith.constant 0.000000e+00 : f32
    %65 = vector.broadcast %cst_26 : f32 to vector<128x16xf32>
    %66 = arith.maximumf %64, %65 : vector<128x16xf32>
    %67 = arith.truncf %66 : vector<128x16xf32> to vector<128x16xbf16>
    %c0_27 = arith.constant 0 : index
    %c0_28 = arith.constant 0 : index
    %68 = vector.load %arg8[%c0_27, %c0_28] : memref<16x128xbf16, #tpu.memory_space<vmem>>, vector<16x128xbf16>
    %cst_29 = arith.constant dense<0.000000e+00> : vector<128x128xf32>
    %69 = tpu.matmul %67, %68, %cst_29 {dimension_numbers = #tpu.dot_dimension_numbers<[1], [0], [0], [1], [0, 0, 1, 1], [], []>} : vector<128x16xbf16>, vector<16x128xbf16>, vector<128x128xf32> -> vector<128x128xf32>
    %c0_30 = arith.constant 0 : index
    %c0_31 = arith.constant 0 : index
    %70 = vector.load %arg9[%c0_30, %c0_31] : memref<1x128xf32, #tpu.memory_space<vmem>>, vector<1x128xf32>
    %71 = vector.broadcast %70 : vector<1x128xf32> to vector<128x128xf32>
    %72 = arith.addf %69, %71 : vector<128x128xf32>
    %c0_32 = arith.constant 0 : index
    %c0_33 = arith.constant 0 : index
    %c0_34 = arith.constant 0 : index
    %73 = vector.load %arg3[%c0_32, %c0_33, %c0_34] : memref<1x16x128xf32, #tpu.memory_space<vmem>>, vector<1x16x128xf32>
    %74 = vector.shape_cast %73 : vector<1x16x128xf32> to vector<16x128xf32>
    %cst_35 = arith.constant dense<0.000000e+00> : vector<16x128xf32>
    %75 = tpu.matmul %74, %72, %cst_35 {dimension_numbers = #tpu.dot_dimension_numbers<[1], [0], [0], [1], [0, 0, 1, 1], [], []>} : vector<16x128xf32>, vector<128x128xf32>, vector<16x128xf32> -> vector<16x128xf32>
    %c0_36 = arith.constant 0 : index
    %c0_37 = arith.constant 0 : index
    %c0_38 = arith.constant 0 : index
    %76 = vector.load %arg10[%c0_36, %c0_37, %c0_38] : memref<1x16x128xf32, #tpu.memory_space<vmem>>, vector<1x16x128xf32>
    %77 = vector.shape_cast %76 : vector<1x16x128xf32> to vector<16x128xf32>
    %78 = vector.shape_cast %75 : vector<16x128xf32> to vector<1x16x128xf32>
    tpu.vector_store %arg10[%c0_36, %c0_37, %c0_38], %78 {strides = array<i32>} : memref<1x16x128xf32, #tpu.memory_space<vmem>>, vector<1x16x128xf32>,
    return
  }
  func.func @transform_0(%arg0: i32) -> (i32, i32, i32) {
    %c0_i32 = arith.constant 0 : i32
    %c0_i32_0 = arith.constant 0 : i32
    %c0_i32_1 = arith.constant 0 : i32
    return %arg0, %c0_i32, %c0_i32_0 : i32, i32, i32
  }
  func.func @transform_1(%arg0: i32) -> (i32, i32, i32) {
    %c0_i32 = arith.constant 0 : i32
    %c0_i32_0 = arith.constant 0 : i32
    %c0_i32_1 = arith.constant 0 : i32
    return %arg0, %c0_i32, %c0_i32_0 : i32, i32, i32
  }
  func.func @transform_2(%arg0: i32) -> (i32, i32, i32) {
    %c0_i32 = arith.constant 0 : i32
    %c0_i32_0 = arith.constant 0 : i32
    %c0_i32_1 = arith.constant 0 : i32
    return %arg0, %c0_i32, %c0_i32_0 : i32, i32, i32
  }
  func.func @transform_3(%arg0: i32) -> (i32, i32) {
    %c0_i32 = arith.constant 0 : i32
    %c0_i32_0 = arith.constant 0 : i32
    %c0_i32_1 = arith.constant 0 : i32
    return %c0_i32, %c0_i32_0 : i32, i32
  }
  func.func @transform_4(%arg0: i32) -> (i32, i32) {
    %c0_i32 = arith.constant 0 : i32
    %c0_i32_0 = arith.constant 0 : i32
    %c0_i32_1 = arith.constant 0 : i32
    return %c0_i32, %c0_i32_0 : i32, i32
  }
  func.func @transform_5(%arg0: i32) -> (i32, i32) {
    %c0_i32 = arith.constant 0 : i32
    %c0_i32_0 = arith.constant 0 : i32
    %c0_i32_1 = arith.constant 0 : i32
    return %c0_i32, %c0_i32_0 : i32, i32
  }
  func.func @transform_6(%arg0: i32) -> (i32, i32) {
    %c0_i32 = arith.constant 0 : i32
    %c0_i32_0 = arith.constant 0 : i32
    %c0_i32_1 = arith.constant 0 : i32
    return %c0_i32, %c0_i32_0 : i32, i32
  }
  func.func @transform_7(%arg0: i32) -> (i32, i32) {
    %c0_i32 = arith.constant 0 : i32
    %c0_i32_0 = arith.constant 0 : i32
    %c0_i32_1 = arith.constant 0 : i32
    return %c0_i32, %c0_i32_0 : i32, i32
  }
  func.func @transform_8(%arg0: i32) -> (i32, i32) {
    %c0_i32 = arith.constant 0 : i32
    %c0_i32_0 = arith.constant 0 : i32
    %c0_i32_1 = arith.constant 0 : i32
    return %c0_i32, %c0_i32_0 : i32, i32
  }
  func.func @transform_9(%arg0: i32) -> (i32, i32, i32) {
    %c0_i32 = arith.constant 0 : i32
    %c0_i32_0 = arith.constant 0 : i32
    %c0_i32_1 = arith.constant 0 : i32
    return %arg0, %c0_i32, %c0_i32_0 : i32, i32, i32
  }
}

</mosaic_0001>

<llo_original>
// kernel: tpu_custom_call.1
$region0: #{tpu_custom_call.1}
  #allocation0 [shape = 'u32[]', space=smem, size = 0x4, offset = 0x4, fixed_abs, tag = 'smem constant byte address 0x4 - core index']
  #allocation1 [shape = 'u32[144,128]{1,0:T(1,128)}', space=vmem, size = 0x12000, scoped, tag = 'internal scratch']
  %s0 = inlined_call_operand.vmem [shape: bf16[2,128,8], index: 0, kind: input, shape index: {}]
  %s1 = inlined_call_operand.vmem [shape: bf16[2,128,128], index: 1, kind: input, shape index: {}]
  %s2 = inlined_call_operand.hbm [shape: f32[2,16,128], index: 2, kind: input, shape index: {}]
  %s3 = inlined_call_operand.hbm [shape: bf16[8,18], index: 3, kind: input, shape index: {}]
  %s4 = inlined_call_operand.vmem [shape: f32[1,16], index: 4, kind: input, shape index: {}]
  %s5 = inlined_call_operand.vmem [shape: bf16[16,18], index: 5, kind: input, shape index: {}]
  %s6 = inlined_call_operand.vmem [shape: f32[1,16], index: 6, kind: input, shape index: {}]
  %s7 = inlined_call_operand.vmem [shape: bf16[16,128], index: 7, kind: input, shape index: {}]
  %s8 = inlined_call_operand.vmem [shape: f32[1,128], index: 8, kind: input, shape index: {}]
  %s9 = inlined_call_operand.hbm [shape: f32[2,16,128], index: 9, kind: output, shape index: {}]
  %s10 = sld [smem:[#allocation0]]
  $region77: #{tpu_custom_call.1} parent=0
    _
  %s12 = ssub.s32 1, %s10
  %s13 = scalar_select 0, %s12, %s10
  $region1: #{tpu_custom_call.1} parent=0
    #allocation2 [shape = 'u8[16384]{0}', space=vmem, size = 0x4000, scoped, tag = 'input window, operand 2']
    #allocation3 [shape = 's32[2]{0}', space=sflag, size = 0x8, scoped, tag = 'scoped memory for tpu_custom_call.1']
    #allocation4 [shape = 's32[2]{0}', space=sflag, size = 0x8, scoped, tag = 'scoped memory for tpu_custom_call.1']
    #allocation5 [shape = 'u8[2048]{0}', space=vmem, size = 0x800, scoped, tag = 'input window, operand 3, single buffered']
    #allocation6 [shape = 's32[1]{0}', space=sflag, size = 0x4, scoped, tag = 'scoped memory for tpu_custom_call.1']
    #allocation7 [shape = 'u8[16384]{0}', space=vmem, size = 0x4000, scoped, tag = 'output window, operand 0']
    %14 = vsyncpa [#allocation3], 0
    %s15 = scalar_lea.sflag [#allocation3], 1
    %16 = vsyncpa %s15, 0
    %17 = vsyncpa [#allocation6], 0
    %18 = vsyncpa [#allocation4], 0
    %s19 = scalar_lea.sflag [#allocation4], 1
    %20 = vsyncpa %s19, 0
    loop: start=0, step=1, limit=4
    $region2: #{tpu_custom_call.1} parent=1 // loop_pre_header
      _
    $region3: #{tpu_custom_call.1} parent=1 // loop_header
      %s22 = sphi 0, %s26
      %p23 = scmp.ge.s32.totalorder %s22, 4
      %s32 = sphi 0, %s34
      %s35 = sphi 0, %s32
      %s36 = sphi 0, %s35
      %s52 = sphi 0, %s36
      %s58 = sphi 0, %s60
      %s61 = sphi 0, %s58
      %s62 = sphi 0, %s61
      %s78 = sphi 0, %s62
      %s84 = sphi 0, %s86
      %s87 = sphi 0, %s84
      %s88 = sphi 0, %s87
      %s104 = sphi 0, %s88
      %s108 = sphi 0, %s108
      %s110 = sphi 0, %s108
      %s111 = sphi 0, %s110
      %s125 = sphi 0, %s111
      %s129 = sphi 0, %s129
      %s131 = sphi 0, %s129
      %s132 = sphi 0, %s131
      %s146 = sphi 0, %s132
      %s150 = sphi 0, %s150
      %s152 = sphi 0, %s150
      %s153 = sphi 0, %s152
      %s167 = sphi 0, %s153
      %s171 = sphi 0, %s171
      %s173 = sphi 0, %s171
      %s174 = sphi 0, %s173
      %s188 = sphi 0, %s174
      %s192 = sphi 0, %s192
      %s194 = sphi 0, %s192
      %s195 = sphi 0, %s194
      %s209 = sphi 0, %s195
      %s213 = sphi 0, %s213
      %s215 = sphi 0, %s213
      %s216 = sphi 0, %s215
      %s230 = sphi 0, %s216
      %s236 = sphi 0, %s238
      %s239 = sphi 0, %s236
      %s240 = sphi 0, %s239
      %s256 = sphi 0, %s240
    $region4: #{tpu_custom_call.1} parent=1 // loop_header_branch
      %25 = sbr.rel (%p23) target = $region8
    $region5: #{tpu_custom_call.1} parent=1 // loop_body
      %s27 = ssub.s32 %s22, 1
      %s28 = ssub.s32 %s22, 2
      %s29 = sadd.s32 %s22, 1
      %s30 = ssub.s32 %s22, %s29
      %p31 = scmp.eq.s32.totalorder %s30, 0
      %s33 = sadd.s32 %s32, 1
      %s34 = scalar_select %p31, %s32, %s33
      %p37 = pneg %p31
      %p38 = scmp.eq.s32.totalorder %s22, 1
      %p39 = por %p37, %p38
      %p40 = scmp.ne.s32.totalorder %s32, %s35
      %p41 = scmp.eq.s32.totalorder %s22, 0
      %p42 = por %p40, %p41
      %p43 = scmp.ne.s32.totalorder %s32, %s35
      %p44 = scmp.eq.s32.totalorder %s27, 1
      %p45 = por %p43, %p44
      %p46 = scmp.ne.s32.totalorder %s35, %s36
      %p47 = scmp.eq.s32.totalorder %s27, 0
      %p48 = por %p46, %p47
      %p49 = scmp.ne.s32.totalorder %s35, %s36
      %p50 = scmp.eq.s32.totalorder %s28, 1
      %p51 = por %p49, %p50
      %p53 = scmp.ne.s32.totalorder %s36, %s52
      %p54 = scmp.eq.s32.totalorder %s28, 0
      %p55 = por %p53, %p54
      %s56 = ssub.s32 %s22, %s29
      %p57 = scmp.eq.s32.totalorder %s56, 0
      %s59 = sadd.s32 %s58, 1
      %s60 = scalar_select %p57, %s58, %s59
      %p63 = pneg %p57
      %p64 = scmp.eq.s32.totalorder %s22, 1
      %p65 = por %p63, %p64
      %p66 = scmp.ne.s32.totalorder %s58, %s61
      %p67 = scmp.eq.s32.totalorder %s22, 0
      %p68 = por %p66, %p67
      %p69 = scmp.ne.s32.totalorder %s58, %s61
      %p70 = scmp.eq.s32.totalorder %s27, 1
      %p71 = por %p69, %p70
      %p72 = scmp.ne.s32.totalorder %s61, %s62
      %p73 = scmp.eq.s32.totalorder %s27, 0
      %p74 = por %p72, %p73
      %p75 = scmp.ne.s32.totalorder %s61, %s62
      %p76 = scmp.eq.s32.totalorder %s28, 1
      %p77 = por %p75, %p76
      %p79 = scmp.ne.s32.totalorder %s62, %s78
      %p80 = scmp.eq.s32.totalorder %s28, 0
      %p81 = por %p79, %p80
      %s82 = ssub.s32 %s22, %s29
      %p83 = scmp.eq.s32.totalorder %s82, 0
      %s85 = sadd.s32 %s84, 1
      %s86 = scalar_select %p83, %s84, %s85
      %p89 = pneg %p83
      %p90 = scmp.eq.s32.totalorder %s22, 1
      %p91 = por %p89, %p90
      %p92 = scmp.ne.s32.totalorder %s84, %s87
      %p93 = scmp.eq.s32.totalorder %s22, 0
      %p94 = por %p92, %p93
      %p95 = scmp.ne.s32.totalorder %s84, %s87
      %p96 = scmp.eq.s32.totalorder %s27, 1
      %p97 = por %p95, %p96
      %p98 = scmp.ne.s32.totalorder %s87, %s88
      %p99 = scmp.eq.s32.totalorder %s27, 0
      %p100 = por %p98, %p99
      %p101 = scmp.ne.s32.totalorder %s87, %s88
      %p102 = scmp.eq.s32.totalorder %s28, 1
      %p103 = por %p101, %p102
      %p105 = scmp.ne.s32.totalorder %s88, %s104
      %p106 = scmp.eq.s32.totalorder %s28, 0
      %p107 = por %p105, %p106
      %s109 = sadd.s32 %s108, 1
      %p112 = scmp.eq.s32.totalorder %s22, 1
      %p113 = scmp.ne.s32.totalorder %s108, %s110
      %p114 = scmp.eq.s32.totalorder %s22, 0
      %p115 = por %p113, %p114
      %p116 = scmp.ne.s32.totalorder %s108, %s110
      %p117 = scmp.eq.s32.totalorder %s27, 1
      %p118 = por %p116, %p117
      %p119 = scmp.ne.s32.totalorder %s110, %s111
      %p120 = scmp.eq.s32.totalorder %s27, 0
      %p121 = por %p119, %p120
      %p122 = scmp.ne.s32.totalorder %s110, %s111
      %p123 = scmp.eq.s32.totalorder %s28, 1
      %p124 = por %p122, %p123
      %p126 = scmp.ne.s32.totalorder %s111, %s125
      %p127 = scmp.eq.s32.totalorder %s28, 0
      %p128 = por %p126, %p127
      %s130 = sadd.s32 %s129, 1
      %p133 = scmp.eq.s32.totalorder %s22, 1
      %p134 = scmp.ne.s32.totalorder %s129, %s131
      %p135 = scmp.eq.s32.totalorder %s22, 0
      %p136 = por %p134, %p135
      %p137 = scmp.ne.s32.totalorder %s129, %s131
      %p138 = scmp.eq.s32.totalorder %s27, 1
      %p139 = por %p137, %p138
      %p140 = scmp.ne.s32.totalorder %s131, %s132
      %p141 = scmp.eq.s32.totalorder %s27, 0
      %p142 = por %p140, %p141
      %p143 = scmp.ne.s32.totalorder %s131, %s132
      %p144 = scmp.eq.s32.totalorder %s28, 1
      %p145 = por %p143, %p144
      %p147 = scmp.ne.s32.totalorder %s132, %s146
      %p148 = scmp.eq.s32.totalorder %s28, 0
      %p149 = por %p147, %p148
      %s151 = sadd.s32 %s150, 1
      %p154 = scmp.eq.s32.totalorder %s22, 1
      %p155 = scmp.ne.s32.totalorder %s150, %s152
      %p156 = scmp.eq.s32.totalorder %s22, 0
      %p157 = por %p155, %p156
      %p158 = scmp.ne.s32.totalorder %s150, %s152
      %p159 = scmp.eq.s32.totalorder %s27, 1
      %p160 = por %p158, %p159
      %p161 = scmp.ne.s32.totalorder %s152, %s153
      %p162 = scmp.eq.s32.totalorder %s27, 0
      %p163 = por %p161, %p162
      %p164 = scmp.ne.s32.totalorder %s152, %s153
      %p165 = scmp.eq.s32.totalorder %s28, 1
      %p166 = por %p164, %p165
      %p168 = scmp.ne.s32.totalorder %s153, %s167
      %p169 = scmp.eq.s32.totalorder %s28, 0
      %p170 = por %p168, %p169
      %s172 = sadd.s32 %s171, 1
      %p175 = scmp.eq.s32.totalorder %s22, 1
      %p176 = scmp.ne.s32.totalorder %s171, %s173
      %p177 = scmp.eq.s32.totalorder %s22, 0
      %p178 = por %p176, %p177
      %p179 = scmp.ne.s32.totalorder %s171, %s173
      %p180 = scmp.eq.s32.totalorder %s27, 1
      %p181 = por %p179, %p180
      %p182 = scmp.ne.s32.totalorder %s173, %s174
      %p183 = scmp.eq.s32.totalorder %s27, 0
      %p184 = por %p182, %p183
      %p185 = scmp.ne.s32.totalorder %s173, %s174
      %p186 = scmp.eq.s32.totalorder %s28, 1
      %p187 = por %p185, %p186
      %p189 = scmp.ne.s32.totalorder %s174, %s188
      %p190 = scmp.eq.s32.totalorder %s28, 0
      %p191 = por %p189, %p190
      %s193 = sadd.s32 %s192, 1
      %p196 = scmp.eq.s32.totalorder %s22, 1
      %p197 = scmp.ne.s32.totalorder %s192, %s194
      %p198 = scmp.eq.s32.totalorder %s22, 0
      %p199 = por %p197, %p198
      %p200 = scmp.ne.s32.totalorder %s192, %s194
      %p201 = scmp.eq.s32.totalorder %s27, 1
      %p202 = por %p200, %p201
      %p203 = scmp.ne.s32.totalorder %s194, %s195
      %p204 = scmp.eq.s32.totalorder %s27, 0
      %p205 = por %p203, %p204
      %p206 = scmp.ne.s32.totalorder %s194, %s195
      %p207 = scmp.eq.s32.totalorder %s28, 1
      %p208 = por %p206, %p207
      %p210 = scmp.ne.s32.totalorder %s195, %s209
      %p211 = scmp.eq.s32.totalorder %s28, 0
      %p212 = por %p210, %p211
      %s214 = sadd.s32 %s213, 1
      %p217 = scmp.eq.s32.totalorder %s22, 1
      %p218 = scmp.ne.s32.totalorder %s213, %s215
      %p219 = scmp.eq.s32.totalorder %s22, 0
      %p220 = por %p218, %p219
      %p221 = scmp.ne.s32.totalorder %s213, %s215
      %p222 = scmp.eq.s32.totalorder %s27, 1
      %p223 = por %p221, %p222
      %p224 = scmp.ne.s32.totalorder %s215, %s216
      %p225 = scmp.eq.s32.totalorder %s27, 0
      %p226 = por %p224, %p225
      %p227 = scmp.ne.s32.totalorder %s215, %s216
      %p228 = scmp.eq.s32.totalorder %s28, 1
      %p229 = por %p227, %p228
      %p231 = scmp.ne.s32.totalorder %s216, %s230
      %p232 = scmp.eq.s32.totalorder %s28, 0
      %p233 = por %p231, %p232
      %s234 = ssub.s32 %s22, %s29
      %p235 = scmp.eq.s32.totalorder %s234, 0
      %s237 = sadd.s32 %s236, 1
      %s238 = scalar_select %p235, %s236, %s237
      %p241 = pneg %p235
      %p242 = scmp.eq.s32.totalorder %s22, 1
      %p243 = por %p241, %p242
      %p244 = scmp.ne.s32.totalorder %s236, %s239
      %p245 = scmp.eq.s32.totalorder %s22, 0
      %p246 = por %p244, %p245
      %p247 = scmp.ne.s32.totalorder %s236, %s239
      %p248 = scmp.eq.s32.totalorder %s27, 1
      %p249 = por %p247, %p248
      %p250 = scmp.ne.s32.totalorder %s239, %s240
      %p251 = scmp.eq.s32.totalorder %s27, 0
      %p252 = por %p250, %p251
      %p253 = scmp.ne.s32.totalorder %s239, %s240
      %p254 = scmp.eq.s32.totalorder %s28, 1
      %p255 = por %p253, %p254
      %p257 = scmp.ne.s32.totalorder %s240, %s256
      %p258 = scmp.eq.s32.totalorder %s28, 0
      %p259 = por %p257, %p258
      %p260 = scmp.le.s32.totalorder 1, %s22
      %p261 = scmp.lt.s32.totalorder %s22, 3
      %p262 = pnand %p260, %p261
      %p263 = pneg %p262
      // Predicated region
      $region9: #{tpu_custom_call.1} parent=5 // pred_check
        _
      $region10: #{tpu_custom_call.1} parent=5 // pred_check_branch
        %265 = sbr.rel (%p262) target = $region12
      $region11: #{tpu_custom_call.1} parent=5 // pred_region
        %s266 = ssub.s32 %s22, 1
        // Predicated region
        $region13: #{tpu_custom_call.1} parent=11 // pred_check
          %p267 = pneg %p121
        $region14: #{tpu_custom_call.1} parent=11 // pred_check_branch
          %269 = sbr.rel (%p267) target = $region16
        $region15: #{tpu_custom_call.1} parent=11 // pred_region
          %s271 = ssub.s32 64, 64
          %272 = vsyncadd [#allocation6], %s271
          %s274 = sshll.u32 [#allocation5], 4
          %s275 = int_to_ptr.vmem [resolvable:$true] %s274
          %277 = dma.hbm_to_vmem [thread:$0]  %s3, 64, %s275, [#allocation6]
        $region16: #{tpu_custom_call.1} parent=11 // pred_fallthru
          _
        // Predicated region
        $region17: #{tpu_custom_call.1} parent=11 // pred_check
          %p278 = pneg %p142
        $region18: #{tpu_custom_call.1} parent=11 // pred_check_branch
          %280 = sbr.rel (%p278) target = $region20
        $region19: #{tpu_custom_call.1} parent=11 // pred_region
          _
        $region20: #{tpu_custom_call.1} parent=11 // pred_fallthru
          _
        // Predicated region
        $region21: #{tpu_custom_call.1} parent=11 // pred_check
          %p281 = pneg %p163
        $region22: #{tpu_custom_call.1} parent=11 // pred_check_branch
          %283 = sbr.rel (%p281) target = $region24
        $region23: #{tpu_custom_call.1} parent=11 // pred_region
          _
        $region24: #{tpu_custom_call.1} parent=11 // pred_fallthru
          _
        // Predicated region
        $region25: #{tpu_custom_call.1} parent=11 // pred_check
          %p284 = pneg %p184
        $region26: #{tpu_custom_call.1} parent=11 // pred_check_branch
          %286 = sbr.rel (%p284) target = $region28
        $region27: #{tpu_custom_call.1} parent=11 // pred_region
          _
        $region28: #{tpu_custom_call.1} parent=11 // pred_fallthru
          _
        // Predicated region
        $region29: #{tpu_custom_call.1} parent=11 // pred_check
          %p287 = pneg %p205
        $region30: #{tpu_custom_call.1} parent=11 // pred_check_branch
          %289 = sbr.rel (%p287) target = $region32
        $region31: #{tpu_custom_call.1} parent=11 // pred_region
          _
        $region32: #{tpu_custom_call.1} parent=11 // pred_fallthru
          _
        // Predicated region
        $region33: #{tpu_custom_call.1} parent=11 // pred_check
          %p290 = pneg %p226
        $region34: #{tpu_custom_call.1} parent=11 // pred_check_branch
          %292 = sbr.rel (%p290) target = $region36
        $region35: #{tpu_custom_call.1} parent=11 // pred_region
          _
        $region36: #{tpu_custom_call.1} parent=11 // pred_fallthru
          _
      $region12: #{tpu_custom_call.1} parent=5 // pred_fallthru
        _
      %p293 = scmp.lt.s32.totalorder %s22, 2
      // Predicated region
      $region37: #{tpu_custom_call.1} parent=5 // pred_check
        %p294 = pneg %p293
      $region38: #{tpu_custom_call.1} parent=5 // pred_check_branch
        %296 = sbr.rel (%p294) target = $region40
      $region39: #{tpu_custom_call.1} parent=5 // pred_region
        // Predicated region
        $region41: #{tpu_custom_call.1} parent=39 // pred_check
          %p297 = pneg %p42
        $region42: #{tpu_custom_call.1} parent=39 // pred_check_branch
          %299 = sbr.rel (%p297) target = $region44
        $region43: #{tpu_custom_call.1} parent=39 // pred_region
          %p300 = scmp.lt.s32.totalorder %s22, 1
          %s301 = scalar_select %p300, %s22, 1
          %s302 = smul.addr %s301, 16
          %s303 = smul.addr %s302, 4
          %s304 = scalar_lea.vmem %s0, %s303
        $region44: #{tpu_custom_call.1} parent=39 // pred_fallthru
          _
        // Predicated region
        $region45: #{tpu_custom_call.1} parent=39 // pred_check
          %p305 = pneg %p68
        $region46: #{tpu_custom_call.1} parent=39 // pred_check_branch
          %307 = sbr.rel (%p305) target = $region48
        $region47: #{tpu_custom_call.1} parent=39 // pred_region
          %p308 = scmp.lt.s32.totalorder %s22, 1
          %s309 = scalar_select %p308, %s22, 1
          %s310 = smul.addr %s309, 16
          %s311 = smul.addr %s310, 4
          %s312 = scalar_lea.vmem %s1, %s311
        $region48: #{tpu_custom_call.1} parent=39 // pred_fallthru
          _
        // Predicated region
        $region49: #{tpu_custom_call.1} parent=39 // pred_check
          %p313 = pneg %p94
        $region50: #{tpu_custom_call.1} parent=39 // pred_check_branch
          %315 = sbr.rel (%p313) target = $region52
        $region51: #{tpu_custom_call.1} parent=39 // pred_region
          %s316 = sand.u32 %s84, 1
          %s317 = scalar_lea.sflag [#allocation3], %s316
          %s318 = sand.u32 %s84, 1
          %s319 = smul.addr %s318, 16
          %s320 = scalar_lea.vmem [#allocation2], %s319
          %s322 = ssub.s32 256, 256
          %323 = vsyncadd %s317, %s322
          %s324 = smul.addr %s22, 2
          %s325 = smul.addr %s324, 128
          %s326 = scalar_lea.hbm %s2, %s325
          %s327 = sshll.u32 %s320, 4
          %s328 = int_to_ptr.vmem [resolvable:$true] %s327
          %333 = dma.hbm_to_vmem [thread:$0]  %s326, 256, %s328, %s317, 128, 128, 8
        $region52: #{tpu_custom_call.1} parent=39 // pred_fallthru
          _
      $region40: #{tpu_custom_call.1} parent=5 // pred_fallthru
        _
      %p334 = scmp.le.s32.totalorder 1, %s22
      %p335 = scmp.lt.s32.totalorder %s22, 3
      %p336 = pnand %p334, %p335
      %p337 = pneg %p336
      // Predicated region
      $region53: #{tpu_custom_call.1} parent=5 // pred_check
        _
      $region54: #{tpu_custom_call.1} parent=5 // pred_check_branch
        %339 = sbr.rel (%p336) target = $region56
      $region55: #{tpu_custom_call.1} parent=5 // pred_region
        %s340 = ssub.s32 %s22, 1
        %s341 = sand.u32 %s87, 1
        %s342 = scalar_lea.sflag [#allocation3], %s341
        %s343 = sand.u32 %s87, 1
        %s344 = smul.addr %s343, 16
        %s345 = scalar_lea.vmem [#allocation2], %s344
        // Predicated region
        $region57: #{tpu_custom_call.1} parent=55 // pred_check
          %p346 = pneg %p100
        $region58: #{tpu_custom_call.1} parent=55 // pred_check_branch
          %348 = sbr.rel (%p346) target = $region60
        $region59: #{tpu_custom_call.1} parent=55 // pred_region
          %349 = dma.done %s342, 256
        $region60: #{tpu_custom_call.1} parent=55 // pred_fallthru
          _
        // Predicated region
        $region61: #{tpu_custom_call.1} parent=55 // pred_check
          %p350 = pneg %p121
        $region62: #{tpu_custom_call.1} parent=55 // pred_check_branch
          %352 = sbr.rel (%p350) target = $region64
        $region63: #{tpu_custom_call.1} parent=55 // pred_region
          %353 = dma.done [#allocation6], 64
        $region64: #{tpu_custom_call.1} parent=55 // pred_fallthru
          _
        %p354 = scmp.lt.s32.totalorder %s27, 1
        %s355 = scalar_select %p354, %s27, 1
        %s356 = smul.addr %s355, 16
        %s357 = smul.addr %s356, 4
        %s358 = scalar_lea.vmem %s0, %s357
        %p359 = pneg %p48
        %p360 = pneg %p45
        %p361 = scmp.lt.s32.totalorder %s27, 1
        %s362 = scalar_select %p361, %s27, 1
        %s363 = smul.addr %s362, 16
        %s364 = smul.addr %s363, 4
        %s365 = scalar_lea.vmem %s1, %s364
        %p366 = pneg %p74
        %p367 = pneg %p71
        %s368 = sand.u32 %s87, 1
        %s369 = scalar_lea.sflag [#allocation3], %s368
        %s370 = sand.u32 %s87, 1
        %s371 = smul.addr %s370, 16
        %s372 = scalar_lea.vmem [#allocation2], %s371
        %p373 = pneg %p100
        %p374 = pneg %p97
        %p375 = pneg %p121
        %p376 = pneg %p118
        %p377 = pneg %p142
        %p378 = pneg %p139
        %p379 = pneg %p163
        %p380 = pneg %p160
        %p381 = pneg %p184
        %p382 = pneg %p181
        %p383 = pneg %p205
        %p384 = pneg %p202
        %p385 = pneg %p226
        %p386 = pneg %p223
        %p387 = pneg %p252
        %p388 = pneg %p249
        %s389 = sand.u32 %s239, 1
        %s390 = scalar_lea.sflag [#allocation4], %s389
        %s391 = sand.u32 %s239, 1
        %s392 = smul.addr %s391, 16
        %s393 = scalar_lea.vmem [#allocation7], %s392
        %p394 = scmp.lt.s32.totalorder %s27, 1
        %s395 = scalar_select %p394, %s27, 1
        %s396 = smul.addr %s395, 16
        %s397 = smul.addr %s396, 4
        %s398 = scalar_lea.vmem %s0, %s397
        %p399 = scmp.lt.s32.totalorder %s27, 1
        %s400 = scalar_select %p399, %s27, 1
        %s401 = smul.addr %s400, 16
        %s402 = smul.addr %s401, 4
        %s403 = scalar_lea.vmem %s1, %s402
        %v405 = vld [vmem:[%s403] sm:$0xf]
        %v406 = vld [vmem:[%s403 + $0x4] sm:$0xf]
        %v407 = vld [vmem:[%s403 + $0x8] sm:$0xf]
        %v408 = vld [vmem:[%s403 + $0xc] sm:$0xf]
        %v409 = vld [vmem:[%s403 + $0x10] sm:$0xf]
        %v410 = vld [vmem:[%s403 + $0x14] sm:$0xf]
        %v411 = vld [vmem:[%s403 + $0x18] sm:$0xf]
        %v412 = vld [vmem:[%s403 + $0x1c] sm:$0xf]
        %v413 = vld [vmem:[%s403 + $0x20] sm:$0xf]
        %v414 = vld [vmem:[%s403 + $0x24] sm:$0xf]
        %v415 = vld [vmem:[%s403 + $0x28] sm:$0xf]
        %v416 = vld [vmem:[%s403 + $0x2c] sm:$0xf]
        %v417 = vld [vmem:[%s403 + $0x30] sm:$0xf]
        %v418 = vld [vmem:[%s403 + $0x34] sm:$0xf]
        %v419 = vld [vmem:[%s403 + $0x38] sm:$0xf]
        %v420 = vld [vmem:[%s403 + $0x3c] sm:$0xf]
        %v421 = vunpack.c.l.bf16 %v405
        %v422 = vunpack.c.l.bf16 %v406
        %v423 = vunpack.c.l.bf16 %v407
        %v424 = vunpack.c.l.bf16 %v408
        %v425 = vunpack.c.l.bf16 %v409
        %v426 = vunpack.c.l.bf16 %v410
        %v427 = vunpack.c.l.bf16 %v411
        %v428 = vunpack.c.l.bf16 %v412
        %v429 = vunpack.c.l.bf16 %v413
        %v430 = vunpack.c.l.bf16 %v414
        %v431 = vunpack.c.l.bf16 %v415
        %v432 = vunpack.c.l.bf16 %v416
        %v433 = vunpack.c.l.bf16 %v417
        %v434 = vunpack.c.l.bf16 %v418
        %v435 = vunpack.c.l.bf16 %v419
        %v436 = vunpack.c.l.bf16 %v420
        %v437 = vld [vmem:[%s398] sm:$0xf]
        %v438 = vld [vmem:[%s398 + $0x4] sm:$0xf]
        %v439 = vld [vmem:[%s398 + $0x8] sm:$0xf]
        %v440 = vld [vmem:[%s398 + $0xc] sm:$0xf]
        %v441 = vld [vmem:[%s398 + $0x10] sm:$0xf]
        %v442 = vld [vmem:[%s398 + $0x14] sm:$0xf]
        %v443 = vld [vmem:[%s398 + $0x18] sm:$0xf]
        %v444 = vld [vmem:[%s398 + $0x1c] sm:$0xf]
        %v445 = vld [vmem:[%s398 + $0x20] sm:$0xf]
        %v446 = vld [vmem:[%s398 + $0x24] sm:$0xf]
        %v447 = vld [vmem:[%s398 + $0x28] sm:$0xf]
        %v448 = vld [vmem:[%s398 + $0x2c] sm:$0xf]
        %v449 = vld [vmem:[%s398 + $0x30] sm:$0xf]
        %v450 = vld [vmem:[%s398 + $0x34] sm:$0xf]
        %v451 = vld [vmem:[%s398 + $0x38] sm:$0xf]
        %v452 = vld [vmem:[%s398 + $0x3c] sm:$0xf]
        %v453 = vld [vmem:[#allocation5] sm:$0xf]
        %v470 = vunpack.c.l.b16 %v437
        %v471 = vunpack.c.l.b16 %v438
        %v472 = vunpack.c.l.b16 %v439
        %v473 = vunpack.c.l.b16 %v440
        %v474 = vunpack.c.l.b16 %v441
        %v475 = vunpack.c.l.b16 %v442
        %v476 = vunpack.c.l.b16 %v443
        %v477 = vunpack.c.l.b16 %v444
        %v478 = vunpack.c.l.b16 %v445
        %v479 = vunpack.c.l.b16 %v446
        %v480 = vunpack.c.l.b16 %v447
        %v481 = vunpack.c.l.b16 %v448
        %v482 = vunpack.c.l.b16 %v449
        %v483 = vunpack.c.l.b16 %v450
        %v484 = vunpack.c.l.b16 %v451
        %v485 = vunpack.c.l.b16 %v452
        %v486 = vpack.c.b16 %v471, %v470
        %v487 = vpack.c.b16 %v473, %v472
        %v488 = vpack.c.b16 %v475, %v474
        %v489 = vpack.c.b16 %v477, %v476
        %v490 = vpack.c.b16 %v479, %v478
        %v491 = vpack.c.b16 %v481, %v480
        %v492 = vpack.c.b16 %v483, %v482
        %v493 = vpack.c.b16 %v485, %v484
        %vm494 = vcmask 64512
        %v496 = vsel %vm494, %v486, 0
        %v499 = vsel %vm494, %v487, 0
        %v502 = vsel %vm494, %v488, 0
        %v505 = vsel %vm494, %v489, 0
        %v508 = vsel %vm494, %v490, 0
        %v511 = vsel %vm494, %v491, 0
        %v514 = vsel %vm494, %v492, 0
        %v517 = vsel %vm494, %v493, 0
        %vm519 = vcmask 1043456
        %v521 = vsel %vm519, %v453, 0
        %523 = vmatprep.subr.bf16.mxu0 0
        %524 = vmatpush1.bf16.msra.mxu0 %v521
        %525 = vmatprep.subr.bf16.mxu0 0
        %526 = vmatpush1.bf16.msra.mxu0 0
        %527 = vmatprep.subr.bf16.mxu0 0
        %528 = vmatpush1.bf16.msra.mxu0 0
        %529 = vmatprep.subr.bf16.mxu0 0
        %530 = vmatpush1.bf16.msra.mxu0 0
        %531 = vmatprep.subr.bf16.mxu0 0
        %532 = vmatpush1.bf16.msra.mxu0 0
        %533 = vmatprep.subr.bf16.mxu0 0
        %534 = vmatpush1.bf16.msra.mxu0 0
        %535 = vmatprep.subr.bf16.mxu0 0
        %536 = vmatpush1.bf16.msra.mxu0 0
        %537 = vmatprep.subr.bf16.mxu0 0
        %538 = vmatpush1.bf16.msra.mxu0 0
        %539 = vmatprep.subr.bf16.mxu0 0
        %540 = vmatpush1.bf16.msra.mxu0 0
        %541 = vmatprep.subr.bf16.mxu0 0
        %542 = vmatpush1.bf16.msra.mxu0 0
        %543 = vmatprep.subr.bf16.mxu0 0
        %544 = vmatpush1.bf16.msra.mxu0 0
        %545 = vmatprep.subr.bf16.mxu0 0
        %546 = vmatpush1.bf16.msra.mxu0 0
        %547 = vmatprep.subr.bf16.mxu0 0
        %548 = vmatpush1.bf16.msra.mxu0 0
        %549 = vmatprep.subr.bf16.mxu0 0
        %550 = vmatpush1.bf16.msra.mxu0 0
        %551 = vmatprep.subr.bf16.mxu0 0
        %552 = vmatpush1.bf16.msra.mxu0 0
        %553 = vmatprep.subr.bf16.mxu0 0
        %554 = vmatpush1.bf16.msra.mxu0 0
        %555 = vmatprep.mubr.bf16.mxu0 0
        %556 = vmatmul.mubr.bf16.gmra.mrb[0].mxu0 %v496
        %v557 = vpop.f32.mrb[0].mxu0
        %v558 = vadd.f32 0.0, %v557
        %v559 = vpop.f32.mrb[0].mxu0
        %v560 = vpop.f32.mrb[0].mxu0
        %v561 = vadd.f32 0.0, %v560
        %v562 = vpop.f32.mrb[0].mxu0
        %563 = vmatprep.mubr.bf16.mxu0 0
        %564 = vmatmul.mubr.bf16.gmra.mrb[0].mxu0 %v499
        %v565 = vpop.f32.mrb[0].mxu0
        %v566 = vadd.f32 0.0, %v565
        %v567 = vpop.f32.mrb[0].mxu0
        %v568 = vpop.f32.mrb[0].mxu0
        %v569 = vadd.f32 0.0, %v568
        %v570 = vpop.f32.mrb[0].mxu0
        %571 = vmatprep.mubr.bf16.mxu0 0
        %572 = vmatmul.mubr.bf16.gmra.mrb[0].mxu0 %v502
        %v573 = vpop.f32.mrb[0].mxu0
        %v574 = vadd.f32 0.0, %v573
        %v575 = vpop.f32.mrb[0].mxu0
        %v576 = vpop.f32.mrb[0].mxu0
        %v577 = vadd.f32 0.0, %v576
        %v578 = vpop.f32.mrb[0].mxu0
        %579 = vmatprep.mubr.bf16.mxu0 0
        %580 = vmatmul.mubr.bf16.gmra.mrb[0].mxu0 %v505
        %v581 = vpop.f32.mrb[0].mxu0
        %v582 = vadd.f32 0.0, %v581
        %v583 = vpop.f32.mrb[0].mxu0
        %v584 = vpop.f32.mrb[0].mxu0
        %v585 = vadd.f32 0.0, %v584
        %v586 = vpop.f32.mrb[0].mxu0
        %587 = vmatprep.mubr.bf16.mxu0 0
        %588 = vmatmul.mubr.bf16.gmra.mrb[0].mxu0 %v508
        %v589 = vpop.f32.mrb[0].mxu0
        %v590 = vadd.f32 0.0, %v589
        %v591 = vpop.f32.mrb[0].mxu0
        %v592 = vpop.f32.mrb[0].mxu0
        %v593 = vadd.f32 0.0, %v592
        %v594 = vpop.f32.mrb[0].mxu0
        %595 = vmatprep.mubr.bf16.mxu0 0
        %596 = vmatmul.mubr.bf16.gmra.mrb[0].mxu0 %v511
        %v597 = vpop.f32.mrb[0].mxu0
        %v598 = vadd.f32 0.0, %v597
        %v599 = vpop.f32.mrb[0].mxu0
        %v600 = vpop.f32.mrb[0].mxu0
        %v601 = vadd.f32 0.0, %v600
        %v602 = vpop.f32.mrb[0].mxu0
        %603 = vmatprep.mubr.bf16.mxu0 0
        %604 = vmatmul.mubr.bf16.gmra.mrb[0].mxu0 %v514
        %v605 = vpop.f32.mrb[0].mxu0
        %v606 = vadd.f32 0.0, %v605
        %v607 = vpop.f32.mrb[0].mxu0
        %v608 = vpop.f32.mrb[0].mxu0
        %v609 = vadd.f32 0.0, %v608
        %v610 = vpop.f32.mrb[0].mxu0
        %611 = vmatprep.mubr.bf16.mxu0 0
        %612 = vmatmul.mubr.bf16.gmra.mrb[0].mxu0 %v517
        %v613 = vpop.f32.mrb[0].mxu0
        %v614 = vadd.f32 0.0, %v613
        %v615 = vpop.f32.mrb[0].mxu0
        %v616 = vpop.f32.mrb[0].mxu0
        %v617 = vadd.f32 0.0, %v616
        %v618 = vpop.f32.mrb[0].mxu0
        %619 = vdwg.mxu0
        %636 = vrot.lane.b32.xlu0 %v558, 112
        %v637 = vpop.permute.xlu0 %636
        %638 = vrot.lane.b32.xlu0 %v561, 112
        %v639 = vpop.permute.xlu0 %638
        %640 = vrot.lane.b32.xlu0 %v566, 112
        %v641 = vpop.permute.xlu0 %640
        %642 = vrot.lane.b32.xlu0 %v569, 112
        %v643 = vpop.permute.xlu0 %642
        %644 = vrot.lane.b32.xlu0 %v574, 112
        %v645 = vpop.permute.xlu0 %644
        %646 = vrot.lane.b32.xlu0 %v577, 112
        %v647 = vpop.permute.xlu0 %646
        %648 = vrot.lane.b32.xlu0 %v582, 112
        %v649 = vpop.permute.xlu0 %648
        %650 = vrot.lane.b32.xlu0 %v585, 112
        %v651 = vpop.permute.xlu0 %650
        %652 = vrot.lane.b32.xlu0 %v590, 112
        %v653 = vpop.permute.xlu0 %652
        %654 = vrot.lane.b32.xlu0 %v593, 112
        %v655 = vpop.permute.xlu0 %654
        %656 = vrot.lane.b32.xlu0 %v598, 112
        %v657 = vpop.permute.xlu0 %656
        %658 = vrot.lane.b32.xlu0 %v601, 112
        %v659 = vpop.permute.xlu0 %658
        %660 = vrot.lane.b32.xlu0 %v606, 112
        %v661 = vpop.permute.xlu0 %660
        %662 = vrot.lane.b32.xlu0 %v609, 112
        %v663 = vpop.permute.xlu0 %662
        %664 = vrot.lane.b32.xlu0 %v614, 112
        %v665 = vpop.permute.xlu0 %664
        %666 = vrot.lane.b32.xlu0 %v617, 112
        %v667 = vpop.permute.xlu0 %666
        %vm668 = vcmask 7168
        %v670 = vsel %vm668, 1.0, 0
        %v672 = vsel %vm668, %v637, 0
        %v674 = vsel %vm668, %v639, 0
        %v676 = vsel %vm668, %v641, 0
        %v678 = vsel %vm668, %v643, 0
        %v680 = vsel %vm668, %v645, 0
        %v682 = vsel %vm668, %v647, 0
        %v684 = vsel %vm668, %v649, 0
        %v686 = vsel %vm668, %v651, 0
        %v688 = vsel %vm668, %v653, 0
        %v690 = vsel %vm668, %v655, 0
        %v692 = vsel %vm668, %v657, 0
        %v694 = vsel %vm668, %v659, 0
        %v696 = vsel %vm668, %v661, 0
        %v698 = vsel %vm668, %v663, 0
        %v700 = vsel %vm668, %v665, 0
        %v702 = vsel %vm668, %v667, 0
        %704 = vmatprep.subr.mxu0 0.0
        %705 = vmatpush1.xpose.msra.mxu0 %v672
        %706 = vmatprep.subr.mxu0 0.0
        %707 = vmatpush1.xpose.msra.mxu0 %v674
        %708 = vmatprep.subr.mxu0 0.0
        %709 = vmatpush1.xpose.msra.mxu0 %v676
        %710 = vmatprep.subr.mxu0 0.0
        %711 = vmatpush1.xpose.msra.mxu0 %v678
        %712 = vmatprep.subr.mxu0 0.0
        %713 = vmatpush1.xpose.msra.mxu0 %v680
        %714 = vmatprep.subr.mxu0 0.0
        %715 = vmatpush1.xpose.msra.mxu0 %v682
        %716 = vmatprep.subr.mxu0 0.0
        %717 = vmatpush1.xpose.msra.mxu0 %v684
        %718 = vmatprep.subr.mxu0 0.0
        %719 = vmatpush1.xpose.msra.mxu0 %v686
        %720 = vmatprep.subr.mxu0 0.0
        %721 = vmatpush1.xpose.msra.mxu0 %v688
        %722 = vmatprep.subr.mxu0 0.0
        %723 = vmatpush1.xpose.msra.mxu0 %v690
        %724 = vmatprep.subr.mxu0 0.0
        %725 = vmatpush1.xpose.msra.mxu0 %v692
        %726 = vmatprep.subr.mxu0 0.0
        %727 = vmatpush1.xpose.msra.mxu0 %v694
        %728 = vmatprep.subr.mxu0 0.0
        %729 = vmatpush1.xpose.msra.mxu0 %v696
        %730 = vmatprep.subr.mxu0 0.0
        %731 = vmatpush1.xpose.msra.mxu0 %v698
        %732 = vmatprep.subr.mxu0 0.0
        %733 = vmatpush1.xpose.msra.mxu0 %v700
        %734 = vmatprep.subr.mxu0 0.0
        %735 = vmatpush1.xpose.msra.mxu0 %v702
        %736 = vmatprep.subr.mxu0 0.0
        %737 = vmatpush1.xpose.msra.mxu0 0.0
        %738 = vmatprep.subr.mxu0 0.0
        %739 = vmatpush1.xpose.msra.mxu0 0.0
        %740 = vmatprep.subr.mxu0 0.0
        %741 = vmatpush1.xpose.msra.mxu0 0.0
        %742 = vmatprep.subr.mxu0 0.0
        %743 = vmatpush1.xpose.msra.mxu0 0.0
        %744 = vmatprep.subr.mxu0 0.0
        %745 = vmatpush1.xpose.msra.mxu0 0.0
        %746 = vmatprep.subr.mxu0 0.0
        %747 = vmatpush1.xpose.msra.mxu0 0.0
        %748 = vmatprep.subr.mxu0 0.0
        %749 = vmatpush1.xpose.msra.mxu0 0.0
        %750 = vmatprep.subr.mxu0 0.0
        %751 = vmatpush1.xpose.msra.mxu0 0.0
        %752 = vmatprep.subr.mxu0 0.0
        %753 = vmatpush1.xpose.msra.mxu0 0.0
        %754 = vmatprep.subr.mxu0 0.0
        %755 = vmatpush1.xpose.msra.mxu0 0.0
        %756 = vmatprep.subr.mxu0 0.0
        %757 = vmatpush1.xpose.msra.mxu0 0.0
        %758 = vmatprep.subr.mxu0 0.0
        %759 = vmatpush1.xpose.msra.mxu0 0.0
        %760 = vmatprep.subr.mxu0 0.0
        %761 = vmatpush1.xpose.msra.mxu0 0.0
        %762 = vmatprep.subr.mxu0 0.0
        %763 = vmatpush1.xpose.msra.mxu0 0.0
        %764 = vmatprep.subr.mxu0 0.0
        %765 = vmatpush1.xpose.msra.mxu0 0.0
        %766 = vmatprep.subr.mxu0 0.0
        %767 = vmatpush1.xpose.msra.mxu0 0.0
        %768 = vmatprep.mubr.f32.mxu0 0.0
        %769 = vmatmul.mubr.f32.gmra.mrb[0].mxu0 %v670
        %v770 = vpop.f32.mrb[0].mxu0
        %v771 = vadd.f32 0.0, %v770
        %v772 = vpop.f32.mrb[0].mxu0
        %773 = vmatprep.mubr.f32.mxu0 0.0
        %774 = vmatmul.mubr.f32.gmra.mrb[0].mxu0 %v670
        %v775 = vpop.f32.mrb[0].mxu0
        %v776 = vadd.f32 0.0, %v775
        %v777 = vpop.f32.mrb[0].mxu0
        %778 = vmatprep.mubr.f32.mxu0 0.0
        %779 = vmatmul.mubr.f32.gmra.mrb[0].mxu0 %v670
        %v780 = vpop.f32.mrb[0].mxu0
        %v781 = vadd.f32 0.0, %v780
        %v782 = vpop.f32.mrb[0].mxu0
        %783 = vmatprep.mubr.f32.mxu0 0.0
        %784 = vmatmul.mubr.f32.gmra.mrb[0].mxu0 %v670
        %v785 = vpop.f32.mrb[0].mxu0
        %v786 = vadd.f32 0.0, %v785
        %v787 = vpop.f32.mrb[0].mxu0
        %788 = vmatprep.mubr.f32.mxu0 0.0
        %789 = vmatmul.mubr.f32.gmra.mrb[0].mxu0 %v670
        %v790 = vpop.f32.mrb[0].mxu0
        %v791 = vadd.f32 0.0, %v790
        %v792 = vpop.f32.mrb[0].mxu0
        %793 = vmatprep.mubr.f32.mxu0 0.0
        %794 = vmatmul.mubr.f32.gmra.mrb[0].mxu0 %v670
        %v795 = vpop.f32.mrb[0].mxu0
        %v796 = vadd.f32 0.0, %v795
        %v797 = vpop.f32.mrb[0].mxu0
        %798 = vmatprep.mubr.f32.mxu0 0.0
        %799 = vmatmul.mubr.f32.gmra.mrb[0].mxu0 %v670
        %v800 = vpop.f32.mrb[0].mxu0
        %v801 = vadd.f32 0.0, %v800
        %v802 = vpop.f32.mrb[0].mxu0
        %803 = vmatprep.mubr.f32.mxu0 0.0
        %804 = vmatmul.mubr.f32.gmra.mrb[0].mxu0 %v670
        %v805 = vpop.f32.mrb[0].mxu0
        %v806 = vadd.f32 0.0, %v805
        %v807 = vpop.f32.mrb[0].mxu0
        %808 = vmatprep.mubr.f32.mxu0 0.0
        %809 = vmatmul.mubr.f32.gmra.mrb[0].mxu0 %v670
        %v810 = vpop.f32.mrb[0].mxu0
        %v811 = vadd.f32 0.0, %v810
        %v812 = vpop.f32.mrb[0].mxu0
        %813 = vmatprep.mubr.f32.mxu0 0.0
        %814 = vmatmul.mubr.f32.gmra.mrb[0].mxu0 %v670
        %v815 = vpop.f32.mrb[0].mxu0
        %v816 = vadd.f32 0.0, %v815
        %v817 = vpop.f32.mrb[0].mxu0
        %818 = vmatprep.mubr.f32.mxu0 0.0
        %819 = vmatmul.mubr.f32.gmra.mrb[0].mxu0 %v670
        %v820 = vpop.f32.mrb[0].mxu0
        %v821 = vadd.f32 0.0, %v820
        %v822 = vpop.f32.mrb[0].mxu0
        %823 = vmatprep.mubr.f32.mxu0 0.0
        %824 = vmatmul.mubr.f32.gmra.mrb[0].mxu0 %v670
        %v825 = vpop.f32.mrb[0].mxu0
        %v826 = vadd.f32 0.0, %v825
        %v827 = vpop.f32.mrb[0].mxu0
        %828 = vmatprep.mubr.f32.mxu0 0.0
        %829 = vmatmul.mubr.f32.gmra.mrb[0].mxu0 %v670
        %v830 = vpop.f32.mrb[0].mxu0
        %v831 = vadd.f32 0.0, %v830
        %v832 = vpop.f32.mrb[0].mxu0
        %833 = vmatprep.mubr.f32.mxu0 0.0
        %834 = vmatmul.mubr.f32.gmra.mrb[0].mxu0 %v670
        %v835 = vpop.f32.mrb[0].mxu0
        %v836 = vadd.f32 0.0, %v835
        %v837 = vpop.f32.mrb[0].mxu0
        %838 = vmatprep.mubr.f32.mxu0 0.0
        %839 = vmatmul.mubr.f32.gmra.mrb[0].mxu0 %v670
        %v840 = vpop.f32.mrb[0].mxu0
        %v841 = vadd.f32 0.0, %v840
        %v842 = vpop.f32.mrb[0].mxu0
        %843 = vmatprep.mubr.f32.mxu0 0.0
        %844 = vmatmul.mubr.f32.gmra.mrb[0].mxu0 %v670
        %v845 = vpop.f32.mrb[0].mxu0
        %v846 = vadd.f32 0.0, %v845
        %v847 = vpop.f32.mrb[0].mxu0
        %848 = vdwg.mxu0
        %849 = vset.pattern.permute.xlu0 17
        %850 = vperm.xlu0 %849, %v558
        %v851 = vpop.permute.xlu0 %850
        %853 = vset.pattern.permute.xlu0 17
        %854 = vperm.xlu0 %853, %v561
        %v855 = vpop.permute.xlu0 %854
        %857 = vset.pattern.permute.xlu0 17
        %858 = vperm.xlu0 %857, %v566
        %v859 = vpop.permute.xlu0 %858
        %861 = vset.pattern.permute.xlu0 17
        %862 = vperm.xlu0 %861, %v569
        %v863 = vpop.permute.xlu0 %862
        %865 = vset.pattern.permute.xlu0 17
        %866 = vperm.xlu0 %865, %v574
        %v867 = vpop.permute.xlu0 %866
        %869 = vset.pattern.permute.xlu0 17
        %870 = vperm.xlu0 %869, %v577
        %v871 = vpop.permute.xlu0 %870
        %873 = vset.pattern.permute.xlu0 17
        %874 = vperm.xlu0 %873, %v582
        %v875 = vpop.permute.xlu0 %874
        %877 = vset.pattern.permute.xlu0 17
        %878 = vperm.xlu0 %877, %v585
        %v879 = vpop.permute.xlu0 %878
        %881 = vset.pattern.permute.xlu0 17
        %882 = vperm.xlu0 %881, %v590
        %v883 = vpop.permute.xlu0 %882
        %885 = vset.pattern.permute.xlu0 17
        %886 = vperm.xlu0 %885, %v593
        %v887 = vpop.permute.xlu0 %886
        %889 = vset.pattern.permute.xlu0 17
        %890 = vperm.xlu0 %889, %v598
        %v891 = vpop.permute.xlu0 %890
        %893 = vset.pattern.permute.xlu0 17
        %894 = vperm.xlu0 %893, %v601
        %v895 = vpop.permute.xlu0 %894
        %897 = vset.pattern.permute.xlu0 17
        %898 = vperm.xlu0 %897, %v606
        %v899 = vpop.permute.xlu0 %898
        %901 = vset.pattern.permute.xlu0 17
        %902 = vperm.xlu0 %901, %v609
        %v903 = vpop.permute.xlu0 %902
        %905 = vset.pattern.permute.xlu0 17
        %906 = vperm.xlu0 %905, %v614
        %v907 = vpop.permute.xlu0 %906
        %909 = vset.pattern.permute.xlu0 17
        %910 = vperm.xlu0 %909, %v617
        %v911 = vpop.permute.xlu0 %910
        %v913 = vadd.f32 %v851, %v771
        %v914 = vadd.f32 %v855, %v776
        %v915 = vadd.f32 %v859, %v781
        %v916 = vadd.f32 %v863, %v786
        %v917 = vadd.f32 %v867, %v791
        %v918 = vadd.f32 %v871, %v796
        %v919 = vadd.f32 %v875, %v801
        %v920 = vadd.f32 %v879, %v806
        %v921 = vadd.f32 %v883, %v811
        %v922 = vadd.f32 %v887, %v816
        %v923 = vadd.f32 %v891, %v821
        %v924 = vadd.f32 %v895, %v826
        %v925 = vadd.f32 %v899, %v831
        %v926 = vadd.f32 %v903, %v836
        %v927 = vadd.f32 %v907, %v841
        %v928 = vadd.f32 %v911, %v846
        %v929 = vmul.f32 %v913, 0.2
        %v930 = vmul.f32 %v914, 0.2
        %v931 = vmul.f32 %v915, 0.2
        %v932 = vmul.f32 %v916, 0.2
        %v933 = vmul.f32 %v917, 0.2
        %v934 = vmul.f32 %v918, 0.2
        %v935 = vmul.f32 %v919, 0.2
        %v936 = vmul.f32 %v920, 0.2
        %v937 = vmul.f32 %v921, 0.2
        %v938 = vmul.f32 %v922, 0.2
        %v939 = vmul.f32 %v923, 0.2
        %v940 = vmul.f32 %v924, 0.2
        %v941 = vmul.f32 %v925, 0.2
        %v942 = vmul.f32 %v926, 0.2
        %v943 = vmul.f32 %v927, 0.2
        %v944 = vmul.f32 %v928, 0.2
        %v945 = vmax.f32 %v913, %v929
        %v946 = vmax.f32 %v914, %v930
        %v947 = vmax.f32 %v915, %v931
        %v948 = vmax.f32 %v916, %v932
        %v949 = vmax.f32 %v917, %v933
        %v950 = vmax.f32 %v918, %v934
        %v951 = vmax.f32 %v919, %v935
        %v952 = vmax.f32 %v920, %v936
        %v953 = vmax.f32 %v921, %v937
        %v954 = vmax.f32 %v922, %v938
        %v955 = vmax.f32 %v923, %v939
        %v956 = vmax.f32 %v924, %v940
        %v957 = vmax.f32 %v925, %v941
        %v958 = vmax.f32 %v926, %v942
        %v959 = vmax.f32 %v927, %v943
        %v960 = vmax.f32 %v928, %v944
        %v961 = vadd.f32 %v945, %v421
        %v962 = vadd.f32 %v946, %v422
        %v963 = vadd.f32 %v947, %v423
        %v964 = vadd.f32 %v948, %v424
        %v965 = vadd.f32 %v949, %v425
        %v966 = vadd.f32 %v950, %v426
        %v967 = vadd.f32 %v951, %v427
        %v968 = vadd.f32 %v952, %v428
        %v969 = vadd.f32 %v953, %v429
        %v970 = vadd.f32 %v954, %v430
        %v971 = vadd.f32 %v955, %v431
        %v972 = vadd.f32 %v956, %v432
        %v973 = vadd.f32 %v957, %v433
        %v974 = vadd.f32 %v958, %v434
        %v975 = vadd.f32 %v959, %v435
        %v976 = vadd.f32 %v960, %v436
        %977 = vmax.xlane.f32.xlu0 %v961
        %v978 = vpop.xlane.xlu0 %977
        %979 = vmax.xlane.f32.xlu0 %v962
        %v980 = vpop.xlane.xlu0 %979
        %981 = vmax.xlane.f32.xlu0 %v963
        %v982 = vpop.xlane.xlu0 %981
        %983 = vmax.xlane.f32.xlu0 %v964
        %v984 = vpop.xlane.xlu0 %983
        %985 = vmax.xlane.f32.xlu0 %v965
        %v986 = vpop.xlane.xlu0 %985
        %987 = vmax.xlane.f32.xlu0 %v966
        %v988 = vpop.xlane.xlu0 %987
        %989 = vmax.xlane.f32.xlu0 %v967
        %v990 = vpop.xlane.xlu0 %989
        %991 = vmax.xlane.f32.xlu0 %v968
        %v992 = vpop.xlane.xlu0 %991
        %993 = vmax.xlane.f32.xlu0 %v969
        %v994 = vpop.xlane.xlu0 %993
        %995 = vmax.xlane.f32.xlu0 %v970
        %v996 = vpop.xlane.xlu0 %995
        %997 = vmax.xlane.f32.xlu0 %v971
        %v998 = vpop.xlane.xlu0 %997
        %999 = vmax.xlane.f32.xlu0 %v972
        %v1000 = vpop.xlane.xlu0 %999
        %1001 = vmax.xlane.f32.xlu0 %v973
        %v1002 = vpop.xlane.xlu0 %1001
        %1003 = vmax.xlane.f32.xlu0 %v974
        %v1004 = vpop.xlane.xlu0 %1003
        %1005 = vmax.xlane.f32.xlu0 %v975
        %v1006 = vpop.xlane.xlu0 %1005
        %1007 = vmax.xlane.f32.xlu0 %v976
        %v1008 = vpop.xlane.xlu0 %1007
        %v1009 = vsub.f32 %v961, %v978
        %v1010 = vsub.f32 %v962, %v980
        %v1011 = vsub.f32 %v963, %v982
        %v1012 = vsub.f32 %v964, %v984
        %v1013 = vsub.f32 %v965, %v986
        %v1014 = vsub.f32 %v966, %v988
        %v1015 = vsub.f32 %v967, %v990
        %v1016 = vsub.f32 %v968, %v992
        %v1017 = vsub.f32 %v969, %v994
        %v1018 = vsub.f32 %v970, %v996
        %v1019 = vsub.f32 %v971, %v998
        %v1020 = vsub.f32 %v972, %v1000
        %v1021 = vsub.f32 %v973, %v1002
        %v1022 = vsub.f32 %v974, %v1004
        %v1023 = vsub.f32 %v975, %v1006
        %v1024 = vsub.f32 %v976, %v1008
        %v1025 = vmul.f32 %v1009, 1.442695
        %v1026 = vpow.pop %v1025
        %v1027 = vmul.f32 %v1010, 1.442695
        %v1028 = vpow.pop %v1027
        %v1029 = vmul.f32 %v1011, 1.442695
        %v1030 = vpow.pop %v1029
        %v1031 = vmul.f32 %v1012, 1.442695
        %v1032 = vpow.pop %v1031
        %v1033 = vmul.f32 %v1013, 1.442695
        %v1034 = vpow.pop %v1033
        %v1035 = vmul.f32 %v1014, 1.442695
        %v1036 = vpow.pop %v1035
        %v1037 = vmul.f32 %v1015, 1.442695
        %v1038 = vpow.pop %v1037
        %v1039 = vmul.f32 %v1016, 1.442695
        %v1040 = vpow.pop %v1039
        %v1041 = vmul.f32 %v1017, 1.442695
        %v1042 = vpow.pop %v1041
        %v1043 = vmul.f32 %v1018, 1.442695
        %v1044 = vpow.pop %v1043
        %v1045 = vmul.f32 %v1019, 1.442695
        %v1046 = vpow.pop %v1045
        %v1047 = vmul.f32 %v1020, 1.442695
        %v1048 = vpow.pop %v1047
        %v1049 = vmul.f32 %v1021, 1.442695
        %v1050 = vpow.pop %v1049
        %v1051 = vmul.f32 %v1022, 1.442695
        %v1052 = vpow.pop %v1051
        %v1053 = vmul.f32 %v1023, 1.442695
        %v1054 = vpow.pop %v1053
        %v1055 = vmul.f32 %v1024, 1.442695
        %v1056 = vpow.pop %v1055
        %1057 = vadd.xlane.f32.xlu0 %v1026
        %v1058 = vpop.xlane.xlu0 %1057
        %1059 = vadd.xlane.f32.xlu0 %v1028
        %v1060 = vpop.xlane.xlu0 %1059
        %1061 = vadd.xlane.f32.xlu0 %v1030
        %v1062 = vpop.xlane.xlu0 %1061
        %1063 = vadd.xlane.f32.xlu0 %v1032
        %v1064 = vpop.xlane.xlu0 %1063
        %1065 = vadd.xlane.f32.xlu0 %v1034
        %v1066 = vpop.xlane.xlu0 %1065
        %1067 = vadd.xlane.f32.xlu0 %v1036
        %v1068 = vpop.xlane.xlu0 %1067
        %1069 = vadd.xlane.f32.xlu0 %v1038
        %v1070 = vpop.xlane.xlu0 %1069
        %1071 = vadd.xlane.f32.xlu0 %v1040
        %v1072 = vpop.xlane.xlu0 %1071
        %1073 = vadd.xlane.f32.xlu0 %v1042
        %v1074 = vpop.xlane.xlu0 %1073
        %1075 = vadd.xlane.f32.xlu0 %v1044
        %v1076 = vpop.xlane.xlu0 %1075
        %1077 = vadd.xlane.f32.xlu0 %v1046
        %v1078 = vpop.xlane.xlu0 %1077
        %1079 = vadd.xlane.f32.xlu0 %v1048
        %v1080 = vpop.xlane.xlu0 %1079
        %1081 = vadd.xlane.f32.xlu0 %v1050
        %v1082 = vpop.xlane.xlu0 %1081
        %1083 = vadd.xlane.f32.xlu0 %v1052
        %v1084 = vpop.xlane.xlu0 %1083
        %1085 = vadd.xlane.f32.xlu0 %v1054
        %v1086 = vpop.xlane.xlu0 %1085
        %1087 = vadd.xlane.f32.xlu0 %v1056
        %v1088 = vpop.xlane.xlu0 %1087
        %v1089 = vrcp.pop %v1058
        %v1090 = vrcp.pop %v1060
        %v1091 = vrcp.pop %v1062
        %v1092 = vrcp.pop %v1064
        %v1093 = vrcp.pop %v1066
        %v1094 = vrcp.pop %v1068
        %v1095 = vrcp.pop %v1070
        %v1096 = vrcp.pop %v1072
        %v1097 = vrcp.pop %v1074
        %v1098 = vrcp.pop %v1076
        %v1099 = vrcp.pop %v1078
        %v1100 = vrcp.pop %v1080
        %v1101 = vrcp.pop %v1082
        %v1102 = vrcp.pop %v1084
        %v1103 = vrcp.pop %v1086
        %v1104 = vrcp.pop %v1088
        %v1105 = vmul.f32 %v1026, %v1089
        %v1106 = vmul.f32 %v1028, %v1090
        %v1107 = vmul.f32 %v1030, %v1091
        %v1108 = vmul.f32 %v1032, %v1092
        %v1109 = vmul.f32 %v1034, %v1093
        %v1110 = vmul.f32 %v1036, %v1094
        %v1111 = vmul.f32 %v1038, %v1095
        %v1112 = vmul.f32 %v1040, %v1096
        %v1113 = vmul.f32 %v1042, %v1097
        %v1114 = vmul.f32 %v1044, %v1098
        %v1115 = vmul.f32 %v1046, %v1099
        %v1116 = vmul.f32 %v1048, %v1100
        %v1117 = vmul.f32 %v1050, %v1101
        %v1118 = vmul.f32 %v1052, %v1102
        %v1119 = vmul.f32 %v1054, %v1103
        %v1120 = vmul.f32 %v1056, %v1104
        %v1121 = vpack.c.bf16 %v1106, %v1105
        %v1122 = vpack.c.bf16 %v1108, %v1107
        %v1123 = vpack.c.bf16 %v1110, %v1109
        %v1124 = vpack.c.bf16 %v1112, %v1111
        %v1125 = vpack.c.bf16 %v1114, %v1113
        %v1126 = vpack.c.bf16 %v1116, %v1115
        %v1127 = vpack.c.bf16 %v1118, %v1117
        %v1128 = vpack.c.bf16 %v1120, %v1119
        %v1129 = vpack.c.bf16 %v561, %v558
        %v1130 = vpack.c.bf16 %v569, %v566
        %v1131 = vpack.c.bf16 %v577, %v574
        %v1132 = vpack.c.bf16 %v585, %v582
        %v1133 = vpack.c.bf16 %v593, %v590
        %v1134 = vpack.c.bf16 %v601, %v598
        %v1135 = vpack.c.bf16 %v609, %v606
        %v1136 = vpack.c.bf16 %v617, %v614
        %v1137 = vld [vmem:[%s4] sm:$0x1]
        %v1139 = vlaneseq
        %v1140 = vshrl.u32 %v1139, 7
        %v1141 = vsub.s32 0, %v1140
        %v1142 = vrot.slane %v1137, %v1141
        %1144 = vmatprep.subr.bf16.mxu0 0
        %1145 = vmatpush1.bf16.msra.mxu0 %v1129
        %1146 = vmatprep.subr.bf16.mxu0 0
        %1147 = vmatpush1.bf16.msra.mxu0 %v1130
        %1148 = vmatprep.subr.bf16.mxu0 0
        %1149 = vmatpush1.bf16.msra.mxu0 %v1131
        %1150 = vmatprep.subr.bf16.mxu0 0
        %1151 = vmatpush1.bf16.msra.mxu0 %v1132
        %1152 = vmatprep.subr.bf16.mxu0 0
        %1153 = vmatpush1.bf16.msra.mxu0 %v1133
        %1154 = vmatprep.subr.bf16.mxu0 0
        %1155 = vmatpush1.bf16.msra.mxu0 %v1134
        %1156 = vmatprep.subr.bf16.mxu0 0
        %1157 = vmatpush1.bf16.msra.mxu0 %v1135
        %1158 = vmatprep.subr.bf16.mxu0 0
        %1159 = vmatpush1.bf16.msra.mxu0 %v1136
        %1160 = vmatprep.subr.bf16.mxu0 0
        %1161 = vmatpush1.bf16.msra.mxu0 0
        %1162 = vmatprep.subr.bf16.mxu0 0
        %1163 = vmatpush1.bf16.msra.mxu0 0
        %1164 = vmatprep.subr.bf16.mxu0 0
        %1165 = vmatpush1.bf16.msra.mxu0 0
        %1166 = vmatprep.subr.bf16.mxu0 0
        %1167 = vmatpush1.bf16.msra.mxu0 0
        %1168 = vmatprep.subr.bf16.mxu0 0
        %1169 = vmatpush1.bf16.msra.mxu0 0
        %1170 = vmatprep.subr.bf16.mxu0 0
        %1171 = vmatpush1.bf16.msra.mxu0 0
        %1172 = vmatprep.subr.bf16.mxu0 0
        %1173 = vmatpush1.bf16.msra.mxu0 0
        %1174 = vmatprep.subr.bf16.mxu0 0
        %1175 = vmatpush1.bf16.msra.mxu0 0
        %1176 = vmatprep.mubr.bf16.mxu0 0
        %1177 = vmatmul.mubr.bf16.gmra.mrb[0].mxu0 %v1121
        %v1178 = vpop.f32.mrb[0].mxu0
        %v1179 = vadd.f32 %v1142, %v1178
        %v1180 = vpop.f32.mrb[0].mxu0
        %v1181 = vpop.f32.mrb[0].mxu0
        %v1182 = vadd.f32 %v1142, %v1181
        %v1183 = vpop.f32.mrb[0].mxu0
        %1184 = vmatprep.mubr.bf16.mxu0 0
        %1185 = vmatmul.mubr.bf16.gmra.mrb[0].mxu0 %v1122
        %v1186 = vpop.f32.mrb[0].mxu0
        %v1187 = vadd.f32 %v1142, %v1186
        %v1188 = vpop.f32.mrb[0].mxu0
        %v1189 = vpop.f32.mrb[0].mxu0
        %v1190 = vadd.f32 %v1142, %v1189
        %v1191 = vpop.f32.mrb[0].mxu0
        %1192 = vmatprep.mubr.bf16.mxu0 0
        %1193 = vmatmul.mubr.bf16.gmra.mrb[0].mxu0 %v1123
        %v1194 = vpop.f32.mrb[0].mxu0
        %v1195 = vadd.f32 %v1142, %v1194
        %v1196 = vpop.f32.mrb[0].mxu0
        %v1197 = vpop.f32.mrb[0].mxu0
        %v1198 = vadd.f32 %v1142, %v1197
        %v1199 = vpop.f32.mrb[0].mxu0
        %1200 = vmatprep.mubr.bf16.mxu0 0
        %1201 = vmatmul.mubr.bf16.gmra.mrb[0].mxu0 %v1124
        %v1202 = vpop.f32.mrb[0].mxu0
        %v1203 = vadd.f32 %v1142, %v1202
        %v1204 = vpop.f32.mrb[0].mxu0
        %v1205 = vpop.f32.mrb[0].mxu0
        %v1206 = vadd.f32 %v1142, %v1205
        %v1207 = vpop.f32.mrb[0].mxu0
        %1208 = vmatprep.mubr.bf16.mxu0 0
        %1209 = vmatmul.mubr.bf16.gmra.mrb[0].mxu0 %v1125
        %v1210 = vpop.f32.mrb[0].mxu0
        %v1211 = vadd.f32 %v1142, %v1210
        %v1212 = vpop.f32.mrb[0].mxu0
        %v1213 = vpop.f32.mrb[0].mxu0
        %v1214 = vadd.f32 %v1142, %v1213
        %v1215 = vpop.f32.mrb[0].mxu0
        %1216 = vmatprep.mubr.bf16.mxu0 0
        %1217 = vmatmul.mubr.bf16.gmra.mrb[0].mxu0 %v1126
        %v1218 = vpop.f32.mrb[0].mxu0
        %v1219 = vadd.f32 %v1142, %v1218
        %v1220 = vpop.f32.mrb[0].mxu0
        %v1221 = vpop.f32.mrb[0].mxu0
        %v1222 = vadd.f32 %v1142, %v1221
        %v1223 = vpop.f32.mrb[0].mxu0
        %1224 = vmatprep.mubr.bf16.mxu0 0
        %1225 = vmatmul.mubr.bf16.gmra.mrb[0].mxu0 %v1127
        %v1226 = vpop.f32.mrb[0].mxu0
        %v1227 = vadd.f32 %v1142, %v1226
        %v1228 = vpop.f32.mrb[0].mxu0
        %v1229 = vpop.f32.mrb[0].mxu0
        %v1230 = vadd.f32 %v1142, %v1229
        %v1231 = vpop.f32.mrb[0].mxu0
        %1232 = vmatprep.mubr.bf16.mxu0 0
        %1233 = vmatmul.mubr.bf16.gmra.mrb[0].mxu0 %v1128
        %v1234 = vpop.f32.mrb[0].mxu0
        %v1235 = vadd.f32 %v1142, %v1234
        %v1236 = vpop.f32.mrb[0].mxu0
        %v1237 = vpop.f32.mrb[0].mxu0
        %v1238 = vadd.f32 %v1142, %v1237
        %v1239 = vpop.f32.mrb[0].mxu0
        %1240 = vdwg.mxu0
        %v1241 = vmax.f32 %v1179, 0.0
        %v1242 = vmax.f32 %v1182, 0.0
        %v1243 = vmax.f32 %v1187, 0.0
        %v1244 = vmax.f32 %v1190, 0.0
        %v1245 = vmax.f32 %v1195, 0.0
        %v1246 = vmax.f32 %v1198, 0.0
        %v1247 = vmax.f32 %v1203, 0.0
        %v1248 = vmax.f32 %v1206, 0.0
        %v1249 = vmax.f32 %v1211, 0.0
        %v1250 = vmax.f32 %v1214, 0.0
        %v1251 = vmax.f32 %v1219, 0.0
        %v1252 = vmax.f32 %v1222, 0.0
        %v1253 = vmax.f32 %v1227, 0.0
        %v1254 = vmax.f32 %v1230, 0.0
        %v1255 = vmax.f32 %v1235, 0.0
        %v1256 = vmax.f32 %v1238, 0.0
        %v1257 = vpack.c.bf16 %v1242, %v1241
        %v1258 = vpack.c.bf16 %v1244, %v1243
        %v1259 = vpack.c.bf16 %v1246, %v1245
        %v1260 = vpack.c.bf16 %v1248, %v1247
        %v1261 = vpack.c.bf16 %v1250, %v1249
        %v1262 = vpack.c.bf16 %v1252, %v1251
        %v1263 = vpack.c.bf16 %v1254, %v1253
        %v1264 = vpack.c.bf16 %v1256, %v1255
        %v1265 = vld [vmem:[%s5] sm:$0xf]
        %v1266 = vld [vmem:[%s5 + $0x4] sm:$0xf]
        %v1269 = vunpack.c.l.b16 %v1265
        %v1270 = vunpack.c.l.b16 %v1266
        %v1271 = vpack.c.b16 %v1270, %v1269
        %vm1273 = vcmask 130048
        %v1275 = vsel %vm1273, %v1257, 0
        %v1278 = vsel %vm1273, %v1258, 0
        %v1281 = vsel %vm1273, %v1259, 0
        %v1284 = vsel %vm1273, %v1260, 0
        %v1287 = vsel %vm1273, %v1261, 0
        %v1290 = vsel %vm1273, %v1262, 0
        %v1293 = vsel %vm1273, %v1263, 0
        %v1296 = vsel %vm1273, %v1264, 0
        %1298 = vmatprep.subr.bf16.mxu0 0
        %1299 = vmatpush1.bf16.msra.mxu0 %v1271
        %1300 = vmatprep.subr.bf16.mxu0 0
        %1301 = vmatpush1.bf16.msra.mxu0 0
        %1302 = vmatprep.subr.bf16.mxu0 0
        %1303 = vmatpush1.bf16.msra.mxu0 0
        %1304 = vmatprep.subr.bf16.mxu0 0
        %1305 = vmatpush1.bf16.msra.mxu0 0
        %1306 = vmatprep.subr.bf16.mxu0 0
        %1307 = vmatpush1.bf16.msra.mxu0 0
        %1308 = vmatprep.subr.bf16.mxu0 0
        %1309 = vmatpush1.bf16.msra.mxu0 0
        %1310 = vmatprep.subr.bf16.mxu0 0
        %1311 = vmatpush1.bf16.msra.mxu0 0
        %1312 = vmatprep.subr.bf16.mxu0 0
        %1313 = vmatpush1.bf16.msra.mxu0 0
        %1314 = vmatprep.subr.bf16.mxu0 0
        %1315 = vmatpush1.bf16.msra.mxu0 0
        %1316 = vmatprep.subr.bf16.mxu0 0
        %1317 = vmatpush1.bf16.msra.mxu0 0
        %1318 = vmatprep.subr.bf16.mxu0 0
        %1319 = vmatpush1.bf16.msra.mxu0 0
        %1320 = vmatprep.subr.bf16.mxu0 0
        %1321 = vmatpush1.bf16.msra.mxu0 0
        %1322 = vmatprep.subr.bf16.mxu0 0
        %1323 = vmatpush1.bf16.msra.mxu0 0
        %1324 = vmatprep.subr.bf16.mxu0 0
        %1325 = vmatpush1.bf16.msra.mxu0 0
        %1326 = vmatprep.subr.bf16.mxu0 0
        %1327 = vmatpush1.bf16.msra.mxu0 0
        %1328 = vmatprep.subr.bf16.mxu0 0
        %1329 = vmatpush1.bf16.msra.mxu0 0
        %1330 = vmatprep.mubr.bf16.mxu0 0
        %1331 = vmatmul.mubr.bf16.gmra.mrb[0].mxu0 %v1275
        %v1332 = vpop.f32.mrb[0].mxu0
        %v1333 = vadd.f32 0.0, %v1332
        %v1334 = vpop.f32.mrb[0].mxu0
        %v1335 = vpop.f32.mrb[0].mxu0
        %v1336 = vadd.f32 0.0, %v1335
        %v1337 = vpop.f32.mrb[0].mxu0
        %1338 = vmatprep.mubr.bf16.mxu0 0
        %1339 = vmatmul.mubr.bf16.gmra.mrb[0].mxu0 %v1278
        %v1340 = vpop.f32.mrb[0].mxu0
        %v1341 = vadd.f32 0.0, %v1340
        %v1342 = vpop.f32.mrb[0].mxu0
        %v1343 = vpop.f32.mrb[0].mxu0
        %v1344 = vadd.f32 0.0, %v1343
        %v1345 = vpop.f32.mrb[0].mxu0
        %1346 = vmatprep.mubr.bf16.mxu0 0
        %1347 = vmatmul.mubr.bf16.gmra.mrb[0].mxu0 %v1281
        %v1348 = vpop.f32.mrb[0].mxu0
        %v1349 = vadd.f32 0.0, %v1348
        %v1350 = vpop.f32.mrb[0].mxu0
        %v1351 = vpop.f32.mrb[0].mxu0
        %v1352 = vadd.f32 0.0, %v1351
        %v1353 = vpop.f32.mrb[0].mxu0
        %1354 = vmatprep.mubr.bf16.mxu0 0
        %1355 = vmatmul.mubr.bf16.gmra.mrb[0].mxu0 %v1284
        %v1356 = vpop.f32.mrb[0].mxu0
        %v1357 = vadd.f32 0.0, %v1356
        %v1358 = vpop.f32.mrb[0].mxu0
        %v1359 = vpop.f32.mrb[0].mxu0
        %v1360 = vadd.f32 0.0, %v1359
        %v1361 = vpop.f32.mrb[0].mxu0
        %1362 = vmatprep.mubr.bf16.mxu0 0
        %1363 = vmatmul.mubr.bf16.gmra.mrb[0].mxu0 %v1287
        %v1364 = vpop.f32.mrb[0].mxu0
        %v1365 = vadd.f32 0.0, %v1364
        %v1366 = vpop.f32.mrb[0].mxu0
        %v1367 = vpop.f32.mrb[0].mxu0
        %v1368 = vadd.f32 0.0, %v1367
        %v1369 = vpop.f32.mrb[0].mxu0
        %1370 = vmatprep.mubr.bf16.mxu0 0
        %1371 = vmatmul.mubr.bf16.gmra.mrb[0].mxu0 %v1290
        %v1372 = vpop.f32.mrb[0].mxu0
        %v1373 = vadd.f32 0.0, %v1372
        %v1374 = vpop.f32.mrb[0].mxu0
        %v1375 = vpop.f32.mrb[0].mxu0
        %v1376 = vadd.f32 0.0, %v1375
        %v1377 = vpop.f32.mrb[0].mxu0
        %1378 = vmatprep.mubr.bf16.mxu0 0
        %1379 = vmatmul.mubr.bf16.gmra.mrb[0].mxu0 %v1293
        %v1380 = vpop.f32.mrb[0].mxu0
        %v1381 = vadd.f32 0.0, %v1380
        %v1382 = vpop.f32.mrb[0].mxu0
        %v1383 = vpop.f32.mrb[0].mxu0
        %v1384 = vadd.f32 0.0, %v1383
        %v1385 = vpop.f32.mrb[0].mxu0
        %1386 = vmatprep.mubr.bf16.mxu0 0
        %1387 = vmatmul.mubr.bf16.gmra.mrb[0].mxu0 %v1296
        %v1388 = vpop.f32.mrb[0].mxu0
        %v1389 = vadd.f32 0.0, %v1388
        %v1390 = vpop.f32.mrb[0].mxu0
        %v1391 = vpop.f32.mrb[0].mxu0
        %v1392 = vadd.f32 0.0, %v1391
        %v1393 = vpop.f32.mrb[0].mxu0
        %1394 = vdwg.mxu0
        %1411 = vrot.lane.b32.xlu0 %v1333, 112
        %v1412 = vpop.permute.xlu0 %1411
        %1413 = vrot.lane.b32.xlu0 %v1336, 112
        %v1414 = vpop.permute.xlu0 %1413
        %1415 = vrot.lane.b32.xlu0 %v1341, 112
        %v1416 = vpop.permute.xlu0 %1415
        %1417 = vrot.lane.b32.xlu0 %v1344, 112
        %v1418 = vpop.permute.xlu0 %1417
        %1419 = vrot.lane.b32.xlu0 %v1349, 112
        %v1420 = vpop.permute.xlu0 %1419
        %1421 = vrot.lane.b32.xlu0 %v1352, 112
        %v1422 = vpop.permute.xlu0 %1421
        %1423 = vrot.lane.b32.xlu0 %v1357, 112
        %v1424 = vpop.permute.xlu0 %1423
        %1425 = vrot.lane.b32.xlu0 %v1360, 112
        %v1426 = vpop.permute.xlu0 %1425
        %1427 = vrot.lane.b32.xlu0 %v1365, 112
        %v1428 = vpop.permute.xlu0 %1427
        %1429 = vrot.lane.b32.xlu0 %v1368, 112
        %v1430 = vpop.permute.xlu0 %1429
        %1431 = vrot.lane.b32.xlu0 %v1373, 112
        %v1432 = vpop.permute.xlu0 %1431
        %1433 = vrot.lane.b32.xlu0 %v1376, 112
        %v1434 = vpop.permute.xlu0 %1433
        %1435 = vrot.lane.b32.xlu0 %v1381, 112
        %v1436 = vpop.permute.xlu0 %1435
        %1437 = vrot.lane.b32.xlu0 %v1384, 112
        %v1438 = vpop.permute.xlu0 %1437
        %1439 = vrot.lane.b32.xlu0 %v1389, 112
        %v1440 = vpop.permute.xlu0 %1439
        %1441 = vrot.lane.b32.xlu0 %v1392, 112
        %v1442 = vpop.permute.xlu0 %1441
        %v1443 = vsel %vm668, %v1412, 0
        %v1445 = vsel %vm668, %v1414, 0
        %v1447 = vsel %vm668, %v1416, 0
        %v1449 = vsel %vm668, %v1418, 0
        %v1451 = vsel %vm668, %v1420, 0
        %v1453 = vsel %vm668, %v1422, 0
        %v1455 = vsel %vm668, %v1424, 0
        %v1457 = vsel %vm668, %v1426, 0
        %v1459 = vsel %vm668, %v1428, 0
        %v1461 = vsel %vm668, %v1430, 0
        %v1463 = vsel %vm668, %v1432, 0
        %v1465 = vsel %vm668, %v1434, 0
        %v1467 = vsel %vm668, %v1436, 0
        %v1469 = vsel %vm668, %v1438, 0
        %v1471 = vsel %vm668, %v1440, 0
        %v1473 = vsel %vm668, %v1442, 0
        %1475 = vmatprep.subr.mxu0 0.0
        %1476 = vmatpush1.xpose.msra.mxu0 %v1443
        %1477 = vmatprep.subr.mxu0 0.0
        %1478 = vmatpush1.xpose.msra.mxu0 %v1445
        %1479 = vmatprep.subr.mxu0 0.0
        %1480 = vmatpush1.xpose.msra.mxu0 %v1447
        %1481 = vmatprep.subr.mxu0 0.0
        %1482 = vmatpush1.xpose.msra.mxu0 %v1449
        %1483 = vmatprep.subr.mxu0 0.0
        %1484 = vmatpush1.xpose.msra.mxu0 %v1451
        %1485 = vmatprep.subr.mxu0 0.0
        %1486 = vmatpush1.xpose.msra.mxu0 %v1453
        %1487 = vmatprep.subr.mxu0 0.0
        %1488 = vmatpush1.xpose.msra.mxu0 %v1455
        %1489 = vmatprep.subr.mxu0 0.0
        %1490 = vmatpush1.xpose.msra.mxu0 %v1457
        %1491 = vmatprep.subr.mxu0 0.0
        %1492 = vmatpush1.xpose.msra.mxu0 %v1459
        %1493 = vmatprep.subr.mxu0 0.0
        %1494 = vmatpush1.xpose.msra.mxu0 %v1461
        %1495 = vmatprep.subr.mxu0 0.0
        %1496 = vmatpush1.xpose.msra.mxu0 %v1463
        %1497 = vmatprep.subr.mxu0 0.0
        %1498 = vmatpush1.xpose.msra.mxu0 %v1465
        %1499 = vmatprep.subr.mxu0 0.0
        %1500 = vmatpush1.xpose.msra.mxu0 %v1467
        %1501 = vmatprep.subr.mxu0 0.0
        %1502 = vmatpush1.xpose.msra.mxu0 %v1469
        %1503 = vmatprep.subr.mxu0 0.0
        %1504 = vmatpush1.xpose.msra.mxu0 %v1471
        %1505 = vmatprep.subr.mxu0 0.0
        %1506 = vmatpush1.xpose.msra.mxu0 %v1473
        %1507 = vmatprep.subr.mxu0 0.0
        %1508 = vmatpush1.xpose.msra.mxu0 0.0
        %1509 = vmatprep.subr.mxu0 0.0
        %1510 = vmatpush1.xpose.msra.mxu0 0.0
        %1511 = vmatprep.subr.mxu0 0.0
        %1512 = vmatpush1.xpose.msra.mxu0 0.0
        %1513 = vmatprep.subr.mxu0 0.0
        %1514 = vmatpush1.xpose.msra.mxu0 0.0
        %1515 = vmatprep.subr.mxu0 0.0
        %1516 = vmatpush1.xpose.msra.mxu0 0.0
        %1517 = vmatprep.subr.mxu0 0.0
        %1518 = vmatpush1.xpose.msra.mxu0 0.0
        %1519 = vmatprep.subr.mxu0 0.0
        %1520 = vmatpush1.xpose.msra.mxu0 0.0
        %1521 = vmatprep.subr.mxu0 0.0
        %1522 = vmatpush1.xpose.msra.mxu0 0.0
        %1523 = vmatprep.subr.mxu0 0.0
        %1524 = vmatpush1.xpose.msra.mxu0 0.0
        %1525 = vmatprep.subr.mxu0 0.0
        %1526 = vmatpush1.xpose.msra.mxu0 0.0
        %1527 = vmatprep.subr.mxu0 0.0
        %1528 = vmatpush1.xpose.msra.mxu0 0.0
        %1529 = vmatprep.subr.mxu0 0.0
        %1530 = vmatpush1.xpose.msra.mxu0 0.0
        %1531 = vmatprep.subr.mxu0 0.0
        %1532 = vmatpush1.xpose.msra.mxu0 0.0
        %1533 = vmatprep.subr.mxu0 0.0
        %1534 = vmatpush1.xpose.msra.mxu0 0.0
        %1535 = vmatprep.subr.mxu0 0.0
        %1536 = vmatpush1.xpose.msra.mxu0 0.0
        %1537 = vmatprep.subr.mxu0 0.0
        %1538 = vmatpush1.xpose.msra.mxu0 0.0
        %1539 = vmatprep.mubr.f32.mxu0 0.0
        %1540 = vmatmul.mubr.f32.gmra.mrb[0].mxu0 %v670
        %v1541 = vpop.f32.mrb[0].mxu0
        %v1542 = vadd.f32 0.0, %v1541
        %v1543 = vpop.f32.mrb[0].mxu0
        %1544 = vmatprep.mubr.f32.mxu0 0.0
        %1545 = vmatmul.mubr.f32.gmra.mrb[0].mxu0 %v670
        %v1546 = vpop.f32.mrb[0].mxu0
        %v1547 = vadd.f32 0.0, %v1546
        %v1548 = vpop.f32.mrb[0].mxu0
        %1549 = vmatprep.mubr.f32.mxu0 0.0
        %1550 = vmatmul.mubr.f32.gmra.mrb[0].mxu0 %v670
        %v1551 = vpop.f32.mrb[0].mxu0
        %v1552 = vadd.f32 0.0, %v1551
        %v1553 = vpop.f32.mrb[0].mxu0
        %1554 = vmatprep.mubr.f32.mxu0 0.0
        %1555 = vmatmul.mubr.f32.gmra.mrb[0].mxu0 %v670
        %v1556 = vpop.f32.mrb[0].mxu0
        %v1557 = vadd.f32 0.0, %v1556
        %v1558 = vpop.f32.mrb[0].mxu0
        %1559 = vmatprep.mubr.f32.mxu0 0.0
        %1560 = vmatmul.mubr.f32.gmra.mrb[0].mxu0 %v670
        %v1561 = vpop.f32.mrb[0].mxu0
        %v1562 = vadd.f32 0.0, %v1561
        %v1563 = vpop.f32.mrb[0].mxu0
        %1564 = vmatprep.mubr.f32.mxu0 0.0
        %1565 = vmatmul.mubr.f32.gmra.mrb[0].mxu0 %v670
        %v1566 = vpop.f32.mrb[0].mxu0
        %v1567 = vadd.f32 0.0, %v1566
        %v1568 = vpop.f32.mrb[0].mxu0
        %1569 = vmatprep.mubr.f32.mxu0 0.0
        %1570 = vmatmul.mubr.f32.gmra.mrb[0].mxu0 %v670
        %v1571 = vpop.f32.mrb[0].mxu0
        %v1572 = vadd.f32 0.0, %v1571
        %v1573 = vpop.f32.mrb[0].mxu0
        %1574 = vmatprep.mubr.f32.mxu0 0.0
        %1575 = vmatmul.mubr.f32.gmra.mrb[0].mxu0 %v670
        %v1576 = vpop.f32.mrb[0].mxu0
        %v1577 = vadd.f32 0.0, %v1576
        %v1578 = vpop.f32.mrb[0].mxu0
        %1579 = vmatprep.mubr.f32.mxu0 0.0
        %1580 = vmatmul.mubr.f32.gmra.mrb[0].mxu0 %v670
        %v1581 = vpop.f32.mrb[0].mxu0
        %v1582 = vadd.f32 0.0, %v1581
        %v1583 = vpop.f32.mrb[0].mxu0
        %1584 = vmatprep.mubr.f32.mxu0 0.0
        %1585 = vmatmul.mubr.f32.gmra.mrb[0].mxu0 %v670
        %v1586 = vpop.f32.mrb[0].mxu0
        %v1587 = vadd.f32 0.0, %v1586
        %v1588 = vpop.f32.mrb[0].mxu0
        %1589 = vmatprep.mubr.f32.mxu0 0.0
        %1590 = vmatmul.mubr.f32.gmra.mrb[0].mxu0 %v670
        %v1591 = vpop.f32.mrb[0].mxu0
        %v1592 = vadd.f32 0.0, %v1591
        %v1593 = vpop.f32.mrb[0].mxu0
        %1594 = vmatprep.mubr.f32.mxu0 0.0
        %1595 = vmatmul.mubr.f32.gmra.mrb[0].mxu0 %v670
        %v1596 = vpop.f32.mrb[0].mxu0
        %v1597 = vadd.f32 0.0, %v1596
        %v1598 = vpop.f32.mrb[0].mxu0
        %1599 = vmatprep.mubr.f32.mxu0 0.0
        %1600 = vmatmul.mubr.f32.gmra.mrb[0].mxu0 %v670
        %v1601 = vpop.f32.mrb[0].mxu0
        %v1602 = vadd.f32 0.0, %v1601
        %v1603 = vpop.f32.mrb[0].mxu0
        %1604 = vmatprep.mubr.f32.mxu0 0.0
        %1605 = vmatmul.mubr.f32.gmra.mrb[0].mxu0 %v670
        %v1606 = vpop.f32.mrb[0].mxu0
        %v1607 = vadd.f32 0.0, %v1606
        %v1608 = vpop.f32.mrb[0].mxu0
        %1609 = vmatprep.mubr.f32.mxu0 0.0
        %1610 = vmatmul.mubr.f32.gmra.mrb[0].mxu0 %v670
        %v1611 = vpop.f32.mrb[0].mxu0
        %v1612 = vadd.f32 0.0, %v1611
        %v1613 = vpop.f32.mrb[0].mxu0
        %1614 = vmatprep.mubr.f32.mxu0 0.0
        %1615 = vmatmul.mubr.f32.gmra.mrb[0].mxu0 %v670
        %v1616 = vpop.f32.mrb[0].mxu0
        %v1617 = vadd.f32 0.0, %v1616
        %v1618 = vpop.f32.mrb[0].mxu0
        %1619 = vdwg.mxu0
        %1620 = vset.pattern.permute.xlu0 17
        %1621 = vperm.xlu0 %1620, %v1333
        %v1622 = vpop.permute.xlu0 %1621
        %1624 = vset.pattern.permute.xlu0 17
        %1625 = vperm.xlu0 %1624, %v1336
        %v1626 = vpop.permute.xlu0 %1625
        %1628 = vset.pattern.permute.xlu0 17
        %1629 = vperm.xlu0 %1628, %v1341
        %v1630 = vpop.permute.xlu0 %1629
        %1632 = vset.pattern.permute.xlu0 17
        %1633 = vperm.xlu0 %1632, %v1344
        %v1634 = vpop.permute.xlu0 %1633
        %1636 = vset.pattern.permute.xlu0 17
        %1637 = vperm.xlu0 %1636, %v1349
        %v1638 = vpop.permute.xlu0 %1637
        %1640 = vset.pattern.permute.xlu0 17
        %1641 = vperm.xlu0 %1640, %v1352
        %v1642 = vpop.permute.xlu0 %1641
        %1644 = vset.pattern.permute.xlu0 17
        %1645 = vperm.xlu0 %1644, %v1357
        %v1646 = vpop.permute.xlu0 %1645
        %1648 = vset.pattern.permute.xlu0 17
        %1649 = vperm.xlu0 %1648, %v1360
        %v1650 = vpop.permute.xlu0 %1649
        %1652 = vset.pattern.permute.xlu0 17
        %1653 = vperm.xlu0 %1652, %v1365
        %v1654 = vpop.permute.xlu0 %1653
        %1656 = vset.pattern.permute.xlu0 17
        %1657 = vperm.xlu0 %1656, %v1368
        %v1658 = vpop.permute.xlu0 %1657
        %1660 = vset.pattern.permute.xlu0 17
        %1661 = vperm.xlu0 %1660, %v1373
        %v1662 = vpop.permute.xlu0 %1661
        %1664 = vset.pattern.permute.xlu0 17
        %1665 = vperm.xlu0 %1664, %v1376
        %v1666 = vpop.permute.xlu0 %1665
        %1668 = vset.pattern.permute.xlu0 17
        %1669 = vperm.xlu0 %1668, %v1381
        %v1670 = vpop.permute.xlu0 %1669
        %1672 = vset.pattern.permute.xlu0 17
        %1673 = vperm.xlu0 %1672, %v1384
        %v1674 = vpop.permute.xlu0 %1673
        %1676 = vset.pattern.permute.xlu0 17
        %1677 = vperm.xlu0 %1676, %v1389
        %v1678 = vpop.permute.xlu0 %1677
        %1680 = vset.pattern.permute.xlu0 17
        %1681 = vperm.xlu0 %1680, %v1392
        %v1682 = vpop.permute.xlu0 %1681
        %v1684 = vadd.f32 %v1622, %v1542
        %v1685 = vadd.f32 %v1626, %v1547
        %v1686 = vadd.f32 %v1630, %v1552
        %v1687 = vadd.f32 %v1634, %v1557
        %v1688 = vadd.f32 %v1638, %v1562
        %v1689 = vadd.f32 %v1642, %v1567
        %v1690 = vadd.f32 %v1646, %v1572
        %v1691 = vadd.f32 %v1650, %v1577
        %v1692 = vadd.f32 %v1654, %v1582
        %v1693 = vadd.f32 %v1658, %v1587
        %v1694 = vadd.f32 %v1662, %v1592
        %v1695 = vadd.f32 %v1666, %v1597
        %v1696 = vadd.f32 %v1670, %v1602
        %v1697 = vadd.f32 %v1674, %v1607
        %v1698 = vadd.f32 %v1678, %v1612
        %v1699 = vadd.f32 %v1682, %v1617
        %v1700 = vmul.f32 %v1684, 0.2
        %v1701 = vmul.f32 %v1685, 0.2
        %v1702 = vmul.f32 %v1686, 0.2
        %v1703 = vmul.f32 %v1687, 0.2
        %v1704 = vmul.f32 %v1688, 0.2
        %v1705 = vmul.f32 %v1689, 0.2
        %v1706 = vmul.f32 %v1690, 0.2
        %v1707 = vmul.f32 %v1691, 0.2
        %v1708 = vmul.f32 %v1692, 0.2
        %v1709 = vmul.f32 %v1693, 0.2
        %v1710 = vmul.f32 %v1694, 0.2
        %v1711 = vmul.f32 %v1695, 0.2
        %v1712 = vmul.f32 %v1696, 0.2
        %v1713 = vmul.f32 %v1697, 0.2
        %v1714 = vmul.f32 %v1698, 0.2
        %v1715 = vmul.f32 %v1699, 0.2
        %v1716 = vmax.f32 %v1684, %v1700
        %v1717 = vmax.f32 %v1685, %v1701
        %v1718 = vmax.f32 %v1686, %v1702
        %v1719 = vmax.f32 %v1687, %v1703
        %v1720 = vmax.f32 %v1688, %v1704
        %v1721 = vmax.f32 %v1689, %v1705
        %v1722 = vmax.f32 %v1690, %v1706
        %v1723 = vmax.f32 %v1691, %v1707
        %v1724 = vmax.f32 %v1692, %v1708
        %v1725 = vmax.f32 %v1693, %v1709
        %v1726 = vmax.f32 %v1694, %v1710
        %v1727 = vmax.f32 %v1695, %v1711
        %v1728 = vmax.f32 %v1696, %v1712
        %v1729 = vmax.f32 %v1697, %v1713
        %v1730 = vmax.f32 %v1698, %v1714
        %v1731 = vmax.f32 %v1699, %v1715
        %v1732 = vadd.f32 %v1716, %v421
        %v1733 = vadd.f32 %v1717, %v422
        %v1734 = vadd.f32 %v1718, %v423
        %v1735 = vadd.f32 %v1719, %v424
        %v1736 = vadd.f32 %v1720, %v425
        %v1737 = vadd.f32 %v1721, %v426
        %v1738 = vadd.f32 %v1722, %v427
        %v1739 = vadd.f32 %v1723, %v428
        %v1740 = vadd.f32 %v1724, %v429
        %v1741 = vadd.f32 %v1725, %v430
        %v1742 = vadd.f32 %v1726, %v431
        %v1743 = vadd.f32 %v1727, %v432
        %v1744 = vadd.f32 %v1728, %v433
        %v1745 = vadd.f32 %v1729, %v434
        %v1746 = vadd.f32 %v1730, %v435
        %v1747 = vadd.f32 %v1731, %v436
        %1748 = vmax.xlane.f32.xlu0 %v1732
        %v1749 = vpop.xlane.xlu0 %1748
        %1750 = vmax.xlane.f32.xlu0 %v1733
        %v1751 = vpop.xlane.xlu0 %1750
        %1752 = vmax.xlane.f32.xlu0 %v1734
        %v1753 = vpop.xlane.xlu0 %1752
        %1754 = vmax.xlane.f32.xlu0 %v1735
        %v1755 = vpop.xlane.xlu0 %1754
        %1756 = vmax.xlane.f32.xlu0 %v1736
        %v1757 = vpop.xlane.xlu0 %1756
        %1758 = vmax.xlane.f32.xlu0 %v1737
        %v1759 = vpop.xlane.xlu0 %1758
        %1760 = vmax.xlane.f32.xlu0 %v1738
        %v1761 = vpop.xlane.xlu0 %1760
        %1762 = vmax.xlane.f32.xlu0 %v1739
        %v1763 = vpop.xlane.xlu0 %1762
        %1764 = vmax.xlane.f32.xlu0 %v1740
        %v1765 = vpop.xlane.xlu0 %1764
        %1766 = vmax.xlane.f32.xlu0 %v1741
        %v1767 = vpop.xlane.xlu0 %1766
        %1768 = vmax.xlane.f32.xlu0 %v1742
        %v1769 = vpop.xlane.xlu0 %1768
        %1770 = vmax.xlane.f32.xlu0 %v1743
        %v1771 = vpop.xlane.xlu0 %1770
        %1772 = vmax.xlane.f32.xlu0 %v1744
        %v1773 = vpop.xlane.xlu0 %1772
        %1774 = vmax.xlane.f32.xlu0 %v1745
        %v1775 = vpop.xlane.xlu0 %1774
        %1776 = vmax.xlane.f32.xlu0 %v1746
        %v1777 = vpop.xlane.xlu0 %1776
        %1778 = vmax.xlane.f32.xlu0 %v1747
        %v1779 = vpop.xlane.xlu0 %1778
        %v1780 = vsub.f32 %v1732, %v1749
        %v1781 = vsub.f32 %v1733, %v1751
        %v1782 = vsub.f32 %v1734, %v1753
        %v1783 = vsub.f32 %v1735, %v1755
        %v1784 = vsub.f32 %v1736, %v1757
        %v1785 = vsub.f32 %v1737, %v1759
        %v1786 = vsub.f32 %v1738, %v1761
        %v1787 = vsub.f32 %v1739, %v1763
        %v1788 = vsub.f32 %v1740, %v1765
        %v1789 = vsub.f32 %v1741, %v1767
        %v1790 = vsub.f32 %v1742, %v1769
        %v1791 = vsub.f32 %v1743, %v1771
        %v1792 = vsub.f32 %v1744, %v1773
        %v1793 = vsub.f32 %v1745, %v1775
        %v1794 = vsub.f32 %v1746, %v1777
        %v1795 = vsub.f32 %v1747, %v1779
        %v1796 = vmul.f32 %v1780, 1.442695
        %v1797 = vpow.pop %v1796
        %v1798 = vmul.f32 %v1781, 1.442695
        %v1799 = vpow.pop %v1798
        %v1800 = vmul.f32 %v1782, 1.442695
        %v1801 = vpow.pop %v1800
        %v1802 = vmul.f32 %v1783, 1.442695
        %v1803 = vpow.pop %v1802
        %v1804 = vmul.f32 %v1784, 1.442695
        %v1805 = vpow.pop %v1804
        %v1806 = vmul.f32 %v1785, 1.442695
        %v1807 = vpow.pop %v1806
        %v1808 = vmul.f32 %v1786, 1.442695
        %v1809 = vpow.pop %v1808
        %v1810 = vmul.f32 %v1787, 1.442695
        %v1811 = vpow.pop %v1810
        %v1812 = vmul.f32 %v1788, 1.442695
        %v1813 = vpow.pop %v1812
        %v1814 = vmul.f32 %v1789, 1.442695
        %v1815 = vpow.pop %v1814
        %v1816 = vmul.f32 %v1790, 1.442695
        %v1817 = vpow.pop %v1816
        %v1818 = vmul.f32 %v1791, 1.442695
        %v1819 = vpow.pop %v1818
        %v1820 = vmul.f32 %v1792, 1.442695
        %v1821 = vpow.pop %v1820
        %v1822 = vmul.f32 %v1793, 1.442695
        %v1823 = vpow.pop %v1822
        %v1824 = vmul.f32 %v1794, 1.442695
        %v1825 = vpow.pop %v1824
        %v1826 = vmul.f32 %v1795, 1.442695
        %v1827 = vpow.pop %v1826
        %1828 = vadd.xlane.f32.xlu0 %v1797
        %v1829 = vpop.xlane.xlu0 %1828
        %1830 = vadd.xlane.f32.xlu0 %v1799
        %v1831 = vpop.xlane.xlu0 %1830
        %1832 = vadd.xlane.f32.xlu0 %v1801
        %v1833 = vpop.xlane.xlu0 %1832
        %1834 = vadd.xlane.f32.xlu0 %v1803
        %v1835 = vpop.xlane.xlu0 %1834
        %1836 = vadd.xlane.f32.xlu0 %v1805
        %v1837 = vpop.xlane.xlu0 %1836
        %1838 = vadd.xlane.f32.xlu0 %v1807
        %v1839 = vpop.xlane.xlu0 %1838
        %1840 = vadd.xlane.f32.xlu0 %v1809
        %v1841 = vpop.xlane.xlu0 %1840
        %1842 = vadd.xlane.f32.xlu0 %v1811
        %v1843 = vpop.xlane.xlu0 %1842
        %1844 = vadd.xlane.f32.xlu0 %v1813
        %v1845 = vpop.xlane.xlu0 %1844
        %1846 = vadd.xlane.f32.xlu0 %v1815
        %v1847 = vpop.xlane.xlu0 %1846
        %1848 = vadd.xlane.f32.xlu0 %v1817
        %v1849 = vpop.xlane.xlu0 %1848
        %1850 = vadd.xlane.f32.xlu0 %v1819
        %v1851 = vpop.xlane.xlu0 %1850
        %1852 = vadd.xlane.f32.xlu0 %v1821
        %v1853 = vpop.xlane.xlu0 %1852
        %1854 = vadd.xlane.f32.xlu0 %v1823
        %v1855 = vpop.xlane.xlu0 %1854
        %1856 = vadd.xlane.f32.xlu0 %v1825
        %v1857 = vpop.xlane.xlu0 %1856
        %1858 = vadd.xlane.f32.xlu0 %v1827
        %v1859 = vpop.xlane.xlu0 %1858
        %v1860 = vrcp.pop %v1829
        %v1861 = vrcp.pop %v1831
        %v1862 = vrcp.pop %v1833
        %v1863 = vrcp.pop %v1835
        %v1864 = vrcp.pop %v1837
        %v1865 = vrcp.pop %v1839
        %v1866 = vrcp.pop %v1841
        %v1867 = vrcp.pop %v1843
        %v1868 = vrcp.pop %v1845
        %v1869 = vrcp.pop %v1847
        %v1870 = vrcp.pop %v1849
        %v1871 = vrcp.pop %v1851
        %v1872 = vrcp.pop %v1853
        %v1873 = vrcp.pop %v1855
        %v1874 = vrcp.pop %v1857
        %v1875 = vrcp.pop %v1859
        %v1876 = vmul.f32 %v1797, %v1860
        %v1877 = vmul.f32 %v1799, %v1861
        %v1878 = vmul.f32 %v1801, %v1862
        %v1879 = vmul.f32 %v1803, %v1863
        %v1880 = vmul.f32 %v1805, %v1864
        %v1881 = vmul.f32 %v1807, %v1865
        %v1882 = vmul.f32 %v1809, %v1866
        %v1883 = vmul.f32 %v1811, %v1867
        %v1884 = vmul.f32 %v1813, %v1868
        %v1885 = vmul.f32 %v1815, %v1869
        %v1886 = vmul.f32 %v1817, %v1870
        %v1887 = vmul.f32 %v1819, %v1871
        %v1888 = vmul.f32 %v1821, %v1872
        %v1889 = vmul.f32 %v1823, %v1873
        %v1890 = vmul.f32 %v1825, %v1874
        %v1891 = vmul.f32 %v1827, %v1875
        %v1892 = vpack.c.bf16 %v1877, %v1876
        %v1893 = vpack.c.bf16 %v1879, %v1878
        %v1894 = vpack.c.bf16 %v1881, %v1880
        %v1895 = vpack.c.bf16 %v1883, %v1882
        %v1896 = vpack.c.bf16 %v1885, %v1884
        %v1897 = vpack.c.bf16 %v1887, %v1886
        %v1898 = vpack.c.bf16 %v1889, %v1888
        %v1899 = vpack.c.bf16 %v1891, %v1890
        %v1900 = vpack.c.bf16 %v1336, %v1333
        %v1901 = vpack.c.bf16 %v1344, %v1341
        %v1902 = vpack.c.bf16 %v1352, %v1349
        %v1903 = vpack.c.bf16 %v1360, %v1357
        %v1904 = vpack.c.bf16 %v1368, %v1365
        %v1905 = vpack.c.bf16 %v1376, %v1373
        %v1906 = vpack.c.bf16 %v1384, %v1381
        %v1907 = vpack.c.bf16 %v1392, %v1389
        %v1908 = vld [vmem:[%s6] sm:$0x1]
        %v1910 = vlaneseq
        %v1911 = vshrl.u32 %v1910, 7
        %v1912 = vsub.s32 0, %v1911
        %v1913 = vrot.slane %v1908, %v1912
        %1915 = vmatprep.subr.bf16.mxu0 0
        %1916 = vmatpush1.bf16.msra.mxu0 %v1900
        %1917 = vmatprep.subr.bf16.mxu0 0
        %1918 = vmatpush1.bf16.msra.mxu0 %v1901
        %1919 = vmatprep.subr.bf16.mxu0 0
        %1920 = vmatpush1.bf16.msra.mxu0 %v1902
        %1921 = vmatprep.subr.bf16.mxu0 0
        %1922 = vmatpush1.bf16.msra.mxu0 %v1903
        %1923 = vmatprep.subr.bf16.mxu0 0
        %1924 = vmatpush1.bf16.msra.mxu0 %v1904
        %1925 = vmatprep.subr.bf16.mxu0 0
        %1926 = vmatpush1.bf16.msra.mxu0 %v1905
        %1927 = vmatprep.subr.bf16.mxu0 0
        %1928 = vmatpush1.bf16.msra.mxu0 %v1906
        %1929 = vmatprep.subr.bf16.mxu0 0
        %1930 = vmatpush1.bf16.msra.mxu0 %v1907
        %1931 = vmatprep.subr.bf16.mxu0 0
        %1932 = vmatpush1.bf16.msra.mxu0 0
        %1933 = vmatprep.subr.bf16.mxu0 0
        %1934 = vmatpush1.bf16.msra.mxu0 0
        %1935 = vmatprep.subr.bf16.mxu0 0
        %1936 = vmatpush1.bf16.msra.mxu0 0
        %1937 = vmatprep.subr.bf16.mxu0 0
        %1938 = vmatpush1.bf16.msra.mxu0 0
        %1939 = vmatprep.subr.bf16.mxu0 0
        %1940 = vmatpush1.bf16.msra.mxu0 0
        %1941 = vmatprep.subr.bf16.mxu0 0
        %1942 = vmatpush1.bf16.msra.mxu0 0
        %1943 = vmatprep.subr.bf16.mxu0 0
        %1944 = vmatpush1.bf16.msra.mxu0 0
        %1945 = vmatprep.subr.bf16.mxu0 0
        %1946 = vmatpush1.bf16.msra.mxu0 0
        %1947 = vmatprep.mubr.bf16.mxu0 0
        %1948 = vmatmul.mubr.bf16.gmra.mrb[0].mxu0 %v1892
        %v1949 = vpop.f32.mrb[0].mxu0
        %v1950 = vadd.f32 %v1913, %v1949
        %v1951 = vpop.f32.mrb[0].mxu0
        %v1952 = vpop.f32.mrb[0].mxu0
        %v1953 = vadd.f32 %v1913, %v1952
        %v1954 = vpop.f32.mrb[0].mxu0
        %1955 = vmatprep.mubr.bf16.mxu0 0
        %1956 = vmatmul.mubr.bf16.gmra.mrb[0].mxu0 %v1893
        %v1957 = vpop.f32.mrb[0].mxu0
        %v1958 = vadd.f32 %v1913, %v1957
        %v1959 = vpop.f32.mrb[0].mxu0
        %v1960 = vpop.f32.mrb[0].mxu0
        %v1961 = vadd.f32 %v1913, %v1960
        %v1962 = vpop.f32.mrb[0].mxu0
        %1963 = vmatprep.mubr.bf16.mxu0 0
        %1964 = vmatmul.mubr.bf16.gmra.mrb[0].mxu0 %v1894
        %v1965 = vpop.f32.mrb[0].mxu0
        %v1966 = vadd.f32 %v1913, %v1965
        %v1967 = vpop.f32.mrb[0].mxu0
        %v1968 = vpop.f32.mrb[0].mxu0
        %v1969 = vadd.f32 %v1913, %v1968
        %v1970 = vpop.f32.mrb[0].mxu0
        %1971 = vmatprep.mubr.bf16.mxu0 0
        %1972 = vmatmul.mubr.bf16.gmra.mrb[0].mxu0 %v1895
        %v1973 = vpop.f32.mrb[0].mxu0
        %v1974 = vadd.f32 %v1913, %v1973
        %v1975 = vpop.f32.mrb[0].mxu0
        %v1976 = vpop.f32.mrb[0].mxu0
        %v1977 = vadd.f32 %v1913, %v1976
        %v1978 = vpop.f32.mrb[0].mxu0
        %1979 = vmatprep.mubr.bf16.mxu0 0
        %1980 = vmatmul.mubr.bf16.gmra.mrb[0].mxu0 %v1896
        %v1981 = vpop.f32.mrb[0].mxu0
        %v1982 = vadd.f32 %v1913, %v1981
        %v1983 = vpop.f32.mrb[0].mxu0
        %v1984 = vpop.f32.mrb[0].mxu0
        %v1985 = vadd.f32 %v1913, %v1984
        %v1986 = vpop.f32.mrb[0].mxu0
        %1987 = vmatprep.mubr.bf16.mxu0 0
        %1988 = vmatmul.mubr.bf16.gmra.mrb[0].mxu0 %v1897
        %v1989 = vpop.f32.mrb[0].mxu0
        %v1990 = vadd.f32 %v1913, %v1989
        %v1991 = vpop.f32.mrb[0].mxu0
        %v1992 = vpop.f32.mrb[0].mxu0
        %v1993 = vadd.f32 %v1913, %v1992
        %v1994 = vpop.f32.mrb[0].mxu0
        %1995 = vmatprep.mubr.bf16.mxu0 0
        %1996 = vmatmul.mubr.bf16.gmra.mrb[0].mxu0 %v1898
        %v1997 = vpop.f32.mrb[0].mxu0
        %v1998 = vadd.f32 %v1913, %v1997
        %v1999 = vpop.f32.mrb[0].mxu0
        %v2000 = vpop.f32.mrb[0].mxu0
        %v2001 = vadd.f32 %v1913, %v2000
        %v2002 = vpop.f32.mrb[0].mxu0
        %2003 = vmatprep.mubr.bf16.mxu0 0
        %2004 = vmatmul.mubr.bf16.gmra.mrb[0].mxu0 %v1899
        %v2005 = vpop.f32.mrb[0].mxu0
        %v2006 = vadd.f32 %v1913, %v2005
        %v2007 = vpop.f32.mrb[0].mxu0
        %v2008 = vpop.f32.mrb[0].mxu0
        %v2009 = vadd.f32 %v1913, %v2008
        %v2010 = vpop.f32.mrb[0].mxu0
        %2011 = vdwg.mxu0
        %v2012 = vmax.f32 %v1950, 0.0
        %v2013 = vmax.f32 %v1953, 0.0
        %v2014 = vmax.f32 %v1958, 0.0
        %v2015 = vmax.f32 %v1961, 0.0
        %v2016 = vmax.f32 %v1966, 0.0
        %v2017 = vmax.f32 %v1969, 0.0
        %v2018 = vmax.f32 %v1974, 0.0
        %v2019 = vmax.f32 %v1977, 0.0
        %v2020 = vmax.f32 %v1982, 0.0
        %v2021 = vmax.f32 %v1985, 0.0
        %v2022 = vmax.f32 %v1990, 0.0
        %v2023 = vmax.f32 %v1993, 0.0
        %v2024 = vmax.f32 %v1998, 0.0
        %v2025 = vmax.f32 %v2001, 0.0
        %v2026 = vmax.f32 %v2006, 0.0
        %v2027 = vmax.f32 %v2009, 0.0
        %v2028 = vpack.c.bf16 %v2013, %v2012
        %v2029 = vpack.c.bf16 %v2015, %v2014
        %v2030 = vpack.c.bf16 %v2017, %v2016
        %v2031 = vpack.c.bf16 %v2019, %v2018
        %v2032 = vpack.c.bf16 %v2021, %v2020
        %v2033 = vpack.c.bf16 %v2023, %v2022
        %v2034 = vpack.c.bf16 %v2025, %v2024
        %v2035 = vpack.c.bf16 %v2027, %v2026
        %v2036 = vld [vmem:[%s7] sm:$0xf]
        %v2037 = vld [vmem:[%s7 + $0x4] sm:$0xf]
        %v2038 = vld [vmem:[%s8] sm:$0x1]
        %v2040 = vlaneseq
        %v2041 = vshrl.u32 %v2040, 7
        %v2042 = vsub.s32 0, %v2041
        %v2043 = vrot.slane %v2038, %v2042
        %v2047 = vunpack.c.l.b16 %v2036
        %v2048 = vunpack.c.l.b16 %v2037
        %v2049 = vpack.c.b16 %v2048, %v2047
        %v2052 = vsel %vm1273, %v2028, 0
        %v2055 = vsel %vm1273, %v2029, 0
        %v2058 = vsel %vm1273, %v2030, 0
        %v2061 = vsel %vm1273, %v2031, 0
        %v2064 = vsel %vm1273, %v2032, 0
        %v2067 = vsel %vm1273, %v2033, 0
        %v2070 = vsel %vm1273, %v2034, 0
        %v2073 = vsel %vm1273, %v2035, 0
        %2075 = vmatprep.subr.bf16.mxu0 0
        %2076 = vmatpush1.bf16.msra.mxu0 %v2049
        %2077 = vmatprep.subr.bf16.mxu0 0
        %2078 = vmatpush1.bf16.msra.mxu0 0
        %2079 = vmatprep.subr.bf16.mxu0 0
        %2080 = vmatpush1.bf16.msra.mxu0 0
        %2081 = vmatprep.subr.bf16.mxu0 0
        %2082 = vmatpush1.bf16.msra.mxu0 0
        %2083 = vmatprep.subr.bf16.mxu0 0
        %2084 = vmatpush1.bf16.msra.mxu0 0
        %2085 = vmatprep.subr.bf16.mxu0 0
        %2086 = vmatpush1.bf16.msra.mxu0 0
        %2087 = vmatprep.subr.bf16.mxu0 0
        %2088 = vmatpush1.bf16.msra.mxu0 0
        %2089 = vmatprep.subr.bf16.mxu0 0
        %2090 = vmatpush1.bf16.msra.mxu0 0
        %2091 = vmatprep.subr.bf16.mxu0 0
        %2092 = vmatpush1.bf16.msra.mxu0 0
        %2093 = vmatprep.subr.bf16.mxu0 0
        %2094 = vmatpush1.bf16.msra.mxu0 0
        %2095 = vmatprep.subr.bf16.mxu0 0
        %2096 = vmatpush1.bf16.msra.mxu0 0
        %2097 = vmatprep.subr.bf16.mxu0 0
        %2098 = vmatpush1.bf16.msra.mxu0 0
        %2099 = vmatprep.subr.bf16.mxu0 0
        %2100 = vmatpush1.bf16.msra.mxu0 0
        %2101 = vmatprep.subr.bf16.mxu0 0
        %2102 = vmatpush1.bf16.msra.mxu0 0
        %2103 = vmatprep.subr.bf16.mxu0 0
        %2104 = vmatpush1.bf16.msra.mxu0 0
        %2105 = vmatprep.subr.bf16.mxu0 0
        %2106 = vmatpush1.bf16.msra.mxu0 0
        %2107 = vmatprep.mubr.bf16.mxu0 0
        %2108 = vmatmul.mubr.bf16.gmra.mrb[0].mxu0 %v2052
        %v2109 = vpop.f32.mrb[0].mxu0
        %v2110 = vadd.f32 %v2043, %v2109
        %v2111 = vpop.f32.mrb[0].mxu0
        %v2112 = vpop.f32.mrb[0].mxu0
        %v2113 = vadd.f32 %v2043, %v2112
        %v2114 = vpop.f32.mrb[0].mxu0
        %2115 = vmatprep.mubr.bf16.mxu0 0
        %2116 = vmatmul.mubr.bf16.gmra.mrb[0].mxu0 %v2055
        %v2117 = vpop.f32.mrb[0].mxu0
        %v2118 = vadd.f32 %v2043, %v2117
        %v2119 = vpop.f32.mrb[0].mxu0
        %v2120 = vpop.f32.mrb[0].mxu0
        %v2121 = vadd.f32 %v2043, %v2120
        %v2122 = vpop.f32.mrb[0].mxu0
        %2123 = vmatprep.mubr.bf16.mxu0 0
        %2124 = vmatmul.mubr.bf16.gmra.mrb[0].mxu0 %v2058
        %v2125 = vpop.f32.mrb[0].mxu0
        %v2126 = vadd.f32 %v2043, %v2125
        %v2127 = vpop.f32.mrb[0].mxu0
        %v2128 = vpop.f32.mrb[0].mxu0
        %v2129 = vadd.f32 %v2043, %v2128
        %v2130 = vpop.f32.mrb[0].mxu0
        %2131 = vmatprep.mubr.bf16.mxu0 0
        %2132 = vmatmul.mubr.bf16.gmra.mrb[0].mxu0 %v2061
        %v2133 = vpop.f32.mrb[0].mxu0
        %v2134 = vadd.f32 %v2043, %v2133
        %v2135 = vpop.f32.mrb[0].mxu0
        %v2136 = vpop.f32.mrb[0].mxu0
        %v2137 = vadd.f32 %v2043, %v2136
        %v2138 = vpop.f32.mrb[0].mxu0
        %2139 = vmatprep.mubr.bf16.mxu0 0
        %2140 = vmatmul.mubr.bf16.gmra.mrb[0].mxu0 %v2064
        %v2141 = vpop.f32.mrb[0].mxu0
        %v2142 = vadd.f32 %v2043, %v2141
        %v2143 = vpop.f32.mrb[0].mxu0
        %v2144 = vpop.f32.mrb[0].mxu0
        %v2145 = vadd.f32 %v2043, %v2144
        %v2146 = vpop.f32.mrb[0].mxu0
        %2147 = vmatprep.mubr.bf16.mxu0 0
        %2148 = vmatmul.mubr.bf16.gmra.mrb[0].mxu0 %v2067
        %v2149 = vpop.f32.mrb[0].mxu0
        %v2150 = vadd.f32 %v2043, %v2149
        %v2151 = vpop.f32.mrb[0].mxu0
        %v2152 = vpop.f32.mrb[0].mxu0
        %v2153 = vadd.f32 %v2043, %v2152
        %v2154 = vpop.f32.mrb[0].mxu0
        %2155 = vmatprep.mubr.bf16.mxu0 0
        %2156 = vmatmul.mubr.bf16.gmra.mrb[0].mxu0 %v2070
        %v2157 = vpop.f32.mrb[0].mxu0
        %v2158 = vadd.f32 %v2043, %v2157
        %v2159 = vpop.f32.mrb[0].mxu0
        %v2160 = vpop.f32.mrb[0].mxu0
        %v2161 = vadd.f32 %v2043, %v2160
        %v2162 = vpop.f32.mrb[0].mxu0
        %2163 = vmatprep.mubr.bf16.mxu0 0
        %2164 = vmatmul.mubr.bf16.gmra.mrb[0].mxu0 %v2073
        %v2165 = vpop.f32.mrb[0].mxu0
        %v2166 = vadd.f32 %v2043, %v2165
        %v2167 = vpop.f32.mrb[0].mxu0
        %v2168 = vpop.f32.mrb[0].mxu0
        %v2169 = vadd.f32 %v2043, %v2168
        %v2170 = vpop.f32.mrb[0].mxu0
        %2171 = vdwg.mxu0
        %v2172 = vld [vmem:[%s345] sm:$0xff]
        %v2173 = vld [vmem:[%s345 + $0x8] sm:$0xff]
        %2174 = vmatprep.subr.mxu0 0.0
        %2175 = vmatpush1.msra.mxu0 %v2110
        %2176 = vmatprep.subr.mxu0 0.0
        %2177 = vmatpush1.msra.mxu0 %v2113
        %2178 = vmatprep.subr.mxu0 0.0
        %2179 = vmatpush1.msra.mxu0 %v2118
        %2180 = vmatprep.subr.mxu0 0.0
        %2181 = vmatpush1.msra.mxu0 %v2121
        %2182 = vmatprep.subr.mxu0 0.0
        %2183 = vmatpush1.msra.mxu0 %v2126
        %2184 = vmatprep.subr.mxu0 0.0
        %2185 = vmatpush1.msra.mxu0 %v2129
        %2186 = vmatprep.subr.mxu0 0.0
        %2187 = vmatpush1.msra.mxu0 %v2134
        %2188 = vmatprep.subr.mxu0 0.0
        %2189 = vmatpush1.msra.mxu0 %v2137
        %2190 = vmatprep.subr.mxu0 0.0
        %2191 = vmatpush1.msra.mxu0 %v2142
        %2192 = vmatprep.subr.mxu0 0.0
        %2193 = vmatpush1.msra.mxu0 %v2145
        %2194 = vmatprep.subr.mxu0 0.0
        %2195 = vmatpush1.msra.mxu0 %v2150
        %2196 = vmatprep.subr.mxu0 0.0
        %2197 = vmatpush1.msra.mxu0 %v2153
        %2198 = vmatprep.subr.mxu0 0.0
        %2199 = vmatpush1.msra.mxu0 %v2158
        %2200 = vmatprep.subr.mxu0 0.0
        %2201 = vmatpush1.msra.mxu0 %v2161
        %2202 = vmatprep.subr.mxu0 0.0
        %2203 = vmatpush1.msra.mxu0 %v2166
        %2204 = vmatprep.subr.mxu0 0.0
        %2205 = vmatpush1.msra.mxu0 %v2169
        %2206 = vmatprep.subr.mxu0 0.0
        %2207 = vmatpush1.msra.mxu0 0.0
        %2208 = vmatprep.subr.mxu0 0.0
        %2209 = vmatpush1.msra.mxu0 0.0
        %2210 = vmatprep.subr.mxu0 0.0
        %2211 = vmatpush1.msra.mxu0 0.0
        %2212 = vmatprep.subr.mxu0 0.0
        %2213 = vmatpush1.msra.mxu0 0.0
        %2214 = vmatprep.subr.mxu0 0.0
        %2215 = vmatpush1.msra.mxu0 0.0
        %2216 = vmatprep.subr.mxu0 0.0
        %2217 = vmatpush1.msra.mxu0 0.0
        %2218 = vmatprep.subr.mxu0 0.0
        %2219 = vmatpush1.msra.mxu0 0.0
        %2220 = vmatprep.subr.mxu0 0.0
        %2221 = vmatpush1.msra.mxu0 0.0
        %2222 = vmatprep.subr.mxu0 0.0
        %2223 = vmatpush1.msra.mxu0 0.0
        %2224 = vmatprep.subr.mxu0 0.0
        %2225 = vmatpush1.msra.mxu0 0.0
        %2226 = vmatprep.subr.mxu0 0.0
        %2227 = vmatpush1.msra.mxu0 0.0
        %2228 = vmatprep.subr.mxu0 0.0
        %2229 = vmatpush1.msra.mxu0 0.0
        %2230 = vmatprep.subr.mxu0 0.0
        %2231 = vmatpush1.msra.mxu0 0.0
        %2232 = vmatprep.subr.mxu0 0.0
        %2233 = vmatpush1.msra.mxu0 0.0
        %2234 = vmatprep.subr.mxu0 0.0
        %2235 = vmatpush1.msra.mxu0 0.0
        %2236 = vmatprep.subr.mxu0 0.0
        %2237 = vmatpush1.msra.mxu0 0.0
        %2238 = vmatprep.mubr.f32.mxu0 0.0
        %2239 = vmatmul.mubr.f32.gmra.mrb[0].mxu0 %v2172
        %v2240 = vpop.f32.mrb[0].mxu0
        %v2241 = vadd.f32 0.0, %v2240
        %v2242 = vpop.f32.mrb[0].mxu0
        %2243 = vmatprep.mubr.f32.mxu0 0.0
        %2244 = vmatmul.mubr.f32.gmra.mrb[0].mxu0 %v2173
        %v2245 = vpop.f32.mrb[0].mxu0
        %v2246 = vadd.f32 0.0, %v2245
        %v2247 = vpop.f32.mrb[0].mxu0
        %2248 = vdwg.mxu0
        %2249 = vst [vmem:[%s393] sm:$0xff] %v2241
        %2250 = vst [vmem:[%s393 + $0x8] sm:$0xff] %v2246
        %s2251 = sand.u32 %s239, 1
        %s2252 = scalar_lea.sflag [#allocation4], %s2251
        %s2253 = sand.u32 %s239, 1
        %s2254 = smul.addr %s2253, 16
        %s2255 = scalar_lea.vmem [#allocation7], %s2254
        // Predicated region
        $region65: #{tpu_custom_call.1} parent=55 // pred_check
          %p2256 = pneg %p249
        $region66: #{tpu_custom_call.1} parent=55 // pred_check_branch
          %2258 = sbr.rel (%p2256) target = $region68
        $region67: #{tpu_custom_call.1} parent=55 // pred_region
          %s2260 = ssub.s32 256, 256
          %2261 = vsyncadd %s2252, %s2260
          %s2262 = smul.addr %s27, 2
          %s2263 = smul.addr %s2262, 128
          %s2264 = scalar_lea.hbm %s9, %s2263
          %s2265 = sshll.u32 %s2255, 4
          %s2266 = int_to_ptr.vmem [resolvable:$true] %s2265
          %2271 = dma.vmem_to_hbm [thread:$0]  %s2266, 256, %s2264, %s2252, 128, 128, 8
        $region68: #{tpu_custom_call.1} parent=55 // pred_fallthru
          _
      $region56: #{tpu_custom_call.1} parent=5 // pred_fallthru
        _
      %p2272 = scmp.le.s32.totalorder 2, %s22
      // Predicated region
      $region69: #{tpu_custom_call.1} parent=5 // pred_check
        %p2273 = pneg %p2272
      $region70: #{tpu_custom_call.1} parent=5 // pred_check_branch
        %2275 = sbr.rel (%p2273) target = $region72
      $region71: #{tpu_custom_call.1} parent=5 // pred_region
        %s2276 = ssub.s32 %s22, 2
        // Predicated region
        $region73: #{tpu_custom_call.1} parent=71 // pred_check
          %p2277 = pneg %p255
        $region74: #{tpu_custom_call.1} parent=71 // pred_check_branch
          %2279 = sbr.rel (%p2277) target = $region76
        $region75: #{tpu_custom_call.1} parent=71 // pred_region
          %s2280 = sand.u32 %s240, 1
          %s2281 = scalar_lea.sflag [#allocation4], %s2280
          %s2282 = sand.u32 %s240, 1
          %s2283 = smul.addr %s2282, 16
          %s2284 = scalar_lea.vmem [#allocation7], %s2283
          %2285 = dma.done %s2281, 256
        $region76: #{tpu_custom_call.1} parent=71 // pred_fallthru
          _
      $region72: #{tpu_custom_call.1} parent=5 // pred_fallthru
        _
    $region6: #{tpu_custom_call.1} parent=1 // loop_footer
      %s26 = sadd.s32 1, %s22
    $region7: #{tpu_custom_call.1} parent=1 // loop_footer_branch
      %21 = sbr.rel target = $region3
    $region8: #{tpu_custom_call.1} parent=1 // loop_exit
      _
    %2286 = vsyncpa [#allocation3], 1
    %s2287 = scalar_lea.sflag [#allocation3], 1
    %2288 = vsyncpa %s2287, 1
    %2289 = vsyncpa [#allocation6], 1
    %2290 = vsyncpa [#allocation4], 1
    %s2291 = scalar_lea.sflag [#allocation4], 1
    %2292 = vsyncpa %s2291, 1

</llo_original>
